<compile_context>
chip_gen: v6e
topology: v6e:2x2x1
jax: 0.10.0
libtpu: 0.0.40
codegen_flags: <defaults>
</compile_context>

<pallas_src>
import math
import numpy as np
import jax
import jax.numpy as jnp
from jax.experimental import pallas as pl
from jax.experimental.pallas import tpu as pltpu

# ----------------------------- model config -----------------------------
HIDDEN = 32          # hidden_dim
EMBED = 32           # embed_dim
WALL_DIM = 2
CLASS_NUM = 10
STATE_DIM = 4
SIZE_DIM = 2
COND = EMBED * 3     # cond_dim
F_IN = HIDDEN + COND         # 128: input width of both main EdgeConv MLPs
N_NODES = 8          # objects per sample
N_GRAPHS = 2         # rooms per sample
BATCH = 4            # samples stacked on the grid axis
SIGMA = 25.0
LOG_SIGMA = math.log(SIGMA)
OUT_LANES = 128      # lane-dense output; real data lives in [:, :STATE_DIM]

# node slab column layout: [x(4) | geo(2) | t(1) | fourier(32) | cat(1) | bidx(1)]
C_X = 0
C_GEO = STATE_DIM
C_T = STATE_DIM + SIZE_DIM
C_TF = C_T + 1
C_CAT = C_TF + EMBED
C_BIDX = C_CAT + 1
D_NODE = C_BIDX + 1  # 41


def _align8(r):
    return -(-r // 8) * 8


# packed weight slab layout: 8-aligned row offsets -> cheap static sublane slices
_W_ORDER = [("emb", CLASS_NUM), ("sig_w", EMBED), ("we_w1", WALL_DIM),
            ("we_w2", EMBED), ("ie_w1", STATE_DIM + SIZE_DIM),
            ("ie_w2", HIDDEN), ("m1_w2", HIDDEN)]
_W_OFF = {}
_o = 0
for _name, _rows in _W_ORDER:
    _W_OFF[_name] = (_o, _rows)
    _o += _align8(_rows)
W_SMALL_ROWS = _o  # 160

_BIAS_ORDER = ["sig_b", "we_b1", "we_b2", "ie_b1", "ie_b2", "m1_b1", "m1_b2", "m2_b1"]
_BIAS_IDX = {n: i for i, n in enumerate(_BIAS_ORDER)}
N_BIAS = len(_BIAS_ORDER)


# ----------------------------- Pallas kernel -----------------------------
def _wslice(ws, name):
    off, rows = _W_OFF[name]
    return ws[off:off + rows]


def _bslice(bias, name):
    i = _BIAS_IDX[name]
    return bias[i:i + 1]


def _edge_conv(feat, w1_fused, w2, b1, b2, mask_bias):
    """Dense EdgeConv with max aggregation.

    feat: [N, F], w1_fused = [Wa | Wb] (lanes), mask_bias[i, j] = 0 if edge j->i else -1e30.
    message(i, j) = relu(x_i @ Wa + (x_j - x_i) @ Wb + b1) @ w2 + b2
    out[i] = max_{j : edge j->i} message(i, j)
    """
    n = feat.shape[0]
    h = w1_fused.shape[1] // 2
    # fused first layer: one MXU pass gives both p (x_i part) and q (x @ Wb)
    pq = jnp.dot(feat, w1_fused, preferred_element_type=jnp.float32)     # [N, 2H]
    p = pq[:, :h] + b1
    q = pq[:, h:]
    r = p - q                                                            # hoisted: [N, H]
    pre = r[:, None, :] + q[None, :, :]                                  # [N, N, H]
    hid = jax.nn.relu(pre)
    h_out = w2.shape[1]
    msg = jnp.dot(hid.reshape(n * n, h), w2,
                  preferred_element_type=jnp.float32).reshape(n, n, h_out) + b2
    # TODO(synk): nodes with no incoming edges yield -1e30 here, while torch_geometric's
    # aggr='max' returns 0 for empty neighborhoods (every node has in-edges in this test).
    return jnp.max(msg + mask_bias[:, :, None], axis=1)                  # [N, H_out]


def cond_score_kernel(node_ref, wall_ref, adj_ref, ws_ref, b_ref, ew1_ref, wout_ref, out_ref):
    f32 = jnp.float32
    n = node_ref.shape[0]

    node = node_ref[...]                                  # [N, D_NODE]
    x = node[:, C_X:C_X + STATE_DIM]
    geo = node[:, C_GEO:C_GEO + SIZE_DIM]
    t = node[:, C_T:C_T + 1]
    tfour = node[:, C_TF:C_TF + EMBED]
    cat_i = node[:, C_CAT:C_CAT + 1].astype(jnp.int32)
    bidx_i = node[:, C_BIDX:C_BIDX + 1].astype(jnp.int32)

    # VPU-only prep first (one-hots + additive adjacency mask), so MXU work is not stalled.
    cls_onehot = (cat_i == jax.lax.broadcasted_iota(
        jnp.int32, (n, CLASS_NUM), 1)).astype(f32)        # [N, CLASS_NUM]
    g_onehot = (bidx_i == jax.lax.broadcasted_iota(
        jnp.int32, (n, N_GRAPHS), 1)).astype(f32)         # [N, G]
    mask_bias = (adj_ref[...] - 1.0) * 1e30               # 0 where edge j->i, -1e30 otherwise

    ws = ws_ref[...]                                      # [160, 32] packed weights
    bias = b_ref[...]                                     # [8, 32]   packed biases
    wout = wout_ref[...]                                  # [33, 128] padded m2_w2 / m2_b2

    # --- class_feat = relu(Embedding(category)) as one-hot matmul ---
    class_feat = jax.nn.relu(
        jnp.dot(cls_onehot, _wslice(ws, "emb"), preferred_element_type=f32))

    # --- sigma_feat = relu(Linear(GaussianFourier(t))) ---
    sigma_feat = jax.nn.relu(
        jnp.dot(tfour, _wslice(ws, "sig_w"), preferred_element_type=f32)
        + _bslice(bias, "sig_b"))

    # --- wall_feat = wall_enc(wall_batch)[obj_batch.batch] (gather as one-hot matmul) ---
    wall_h = jax.nn.relu(jnp.dot(wall_ref[...], _wslice(ws, "we_w1"),
                                 preferred_element_type=f32) + _bslice(bias, "we_b1"))
    wall_h = jax.nn.relu(jnp.dot(wall_h, _wslice(ws, "we_w2"),
                                 preferred_element_type=f32) + _bslice(bias, "we_b2"))
    wall_feat = jnp.dot(g_onehot, wall_h, preferred_element_type=f32)

    total_cond_feat = jnp.concatenate([class_feat, sigma_feat, wall_feat], axis=-1)  # [N, 96]

    # --- obj_init_feat = init_enc(cat([x, geo])) ---
    xin = jnp.concatenate([x, geo], axis=-1)              # [N, 6]
    h = jax.nn.relu(jnp.dot(xin, _wslice(ws, "ie_w1"),
                            preferred_element_type=f32) + _bslice(bias, "ie_b1"))
    h = jax.nn.relu(jnp.dot(h, _wslice(ws, "ie_w2"),
                            preferred_element_type=f32) + _bslice(bias, "ie_b2"))

    # --- main backbone ---
    feat = jnp.concatenate([h, total_cond_feat], axis=-1)                 # [N, 128]
    x1 = jax.nn.relu(_edge_conv(feat, ew1_ref[0], _wslice(ws, "m1_w2"),
                                _bslice(bias, "m1_b1"), _bslice(bias, "m1_b2"),
                                mask_bias))                               # [N, 32]
    feat2 = jnp.concatenate([x1, total_cond_feat], axis=-1)               # [N, 128]
    x2 = _edge_conv(feat2, ew1_ref[1], wout[:HIDDEN],
                    _bslice(bias, "m2_b1"), wout[HIDDEN:HIDDEN + 1],
                    mask_bias)                                            # [N, 128] (padded)

    # --- x / (marginal_prob_std(t) + 1e-7) ---
    std = jnp.sqrt((jnp.exp(2.0 * t * LOG_SIGMA) - 1.0) / (2.0 * LOG_SIGMA))
    out_ref[...] = x2 / (std + 1e-7)


# ----------------------------- wrapper -----------------------------
def gaussian_fourier(t_flat, w):
    x_proj = t_flat[..., None] * w * 2.0 * np.pi
    return jnp.concatenate([jnp.sin(x_proj), jnp.cos(x_proj)], axis=-1)


def pack_params(params):
    ws = jnp.zeros((W_SMALL_ROWS, HIDDEN), jnp.float32)
    for name, _rows in _W_ORDER:
        off, rows = _W_OFF[name]
        ws = ws.at[off:off + rows, :].set(params[name])
    bias = jnp.concatenate([params[n] for n in _BIAS_ORDER], axis=0)      # [8, 32]
    # fused EdgeConv first layers: [Wa | Wb] along lanes, stacked for conv1/conv2
    edge_w1 = jnp.stack([
        jnp.concatenate([params["m1_w1"][:F_IN], params["m1_w1"][F_IN:]], axis=1),
        jnp.concatenate([params["m2_w1"][:F_IN], params["m2_w1"][F_IN:]], axis=1),
    ], axis=0)                                                            # [2, 128, 64]
    # lane-dense output weight/bias (zero-padded to 128 lanes)
    w_out = jnp.zeros((HIDDEN + 1, OUT_LANES), jnp.float32)
    w_out = w_out.at[:HIDDEN, :STATE_DIM].set(params["m2_w2"])
    w_out = w_out.at[HIDDEN:, :STATE_DIM].set(params["m2_b2"])
    return ws, bias, edge_w1, w_out


@jax.jit
def cond_score_forward(params, wall, x_obj, geo, cat, bidx, t, adj):
    b = x_obj.shape[0]
    t_fourier = gaussian_fourier(t[..., 0], params["gfp_w"])              # glue: sin/cos
    node = jnp.concatenate(
        [x_obj, geo, t, t_fourier,
         cat.astype(jnp.float32), bidx.astype(jnp.float32)], axis=-1)     # [B, N, 41]
    w_small, bias, edge_w1, w_out = pack_params(params)

    out = pl.pallas_call(
        cond_score_kernel,
        out_shape=jax.ShapeDtypeStruct((b, N_NODES, OUT_LANES), jnp.float32),
        grid_spec=pltpu.PrefetchScalarGridSpec(
            num_scalar_prefetch=0,
            grid=(b,),
            in_specs=[
                pl.BlockSpec((None, N_NODES, D_NODE), lambda i: (i, 0, 0)),
                pl.BlockSpec((None, N_GRAPHS, WALL_DIM), lambda i: (i, 0, 0)),
                pl.BlockSpec((None, N_NODES, N_NODES), lambda i: (i, 0, 0)),
                pl.BlockSpec((W_SMALL_ROWS, HIDDEN), lambda i: (0, 0)),
                pl.BlockSpec((N_BIAS, HIDDEN), lambda i: (0, 0)),
                pl.BlockSpec((2, F_IN, 2 * HIDDEN), lambda i: (0, 0, 0)),
                pl.BlockSpec((HIDDEN + 1, OUT_LANES), lambda i: (0, 0)),
            ],
            out_specs=pl.BlockSpec((None, N_NODES, OUT_LANES), lambda i: (i, 0, 0)),
        ),
        compiler_params=pltpu.CompilerParams(dimension_semantics=("parallel",)),
    )(node, wall, adj, w_small, bias, edge_w1, w_out)
    return out[..., :STATE_DIM]


# ----------------------------- pure-JAX reference -----------------------------
def _edge_conv_ref(x, edge_index, w1, b1, w2, b2):
    src, dst = edge_index[0], edge_index[1]       # j -> i
    x_i = x[dst]
    x_j = x[src]
    m = jnp.concatenate([x_i, x_j - x_i], axis=-1)
    m = jax.nn.relu(m @ w1 + b1) @ w2 + b2
    return jax.ops.segment_max(m, dst, num_segments=x.shape[0])


def forward_ref_single(params, wall, x_obj, geo, cat, bidx, t, edge_index):
    class_feat = jax.nn.relu(params["emb"][cat[:, 0]])
    tf = gaussian_fourier(t[:, 0], params["gfp_w"])
    sigma_feat = jax.nn.relu(tf @ params["sig_w"] + params["sig_b"])
    wall_h = jax.nn.relu(wall @ params["we_w1"] + params["we_b1"])
    wall_h = jax.nn.relu(wall_h @ params["we_w2"] + params["we_b2"])
    wall_feat = wall_h[bidx[:, 0]]
    cond = jnp.concatenate([class_feat, sigma_feat, wall_feat], axis=-1)
    h = jax.nn.relu(jnp.concatenate([x_obj, geo], -1) @ params["ie_w1"] + params["ie_b1"])
    h = jax.nn.relu(h @ params["ie_w2"] + params["ie_b2"])
    feat = jnp.concatenate([h, cond], axis=-1)
    x1 = jax.nn.relu(_edge_conv_ref(feat, edge_index, params["m1_w1"], params["m1_b1"],
                                    params["m1_w2"], params["m1_b2"]))
    feat2 = jnp.concatenate([x1, cond], axis=-1)
    x2 = _edge_conv_ref(feat2, edge_index, params["m2_w1"], params["m2_b1"],
                        params["m2_w2"], params["m2_b2"])
    std = jnp.sqrt((jnp.exp(2.0 * t * LOG_SIGMA) - 1.0) / (2.0 * LOG_SIGMA))
    return x2 / (std + 1e-7)


# ----------------------------- main -----------------------------
if __name__ == "__main__":
    key = jax.random.PRNGKey(0)
    ks = iter(jax.random.split(key, 64))

    def init(shape, scale=0.1):
        return (scale * jax.random.normal(next(ks), shape)).astype(jnp.float32)

    params = {
        # GaussianFourierProjection (fixed random features, scale=30.0)
        "gfp_w": (30.0 * jax.random.normal(next(ks), (EMBED // 2,))).astype(jnp.float32),
        # embed_sigma Linear(embed, embed)
        "sig_w": init((EMBED, EMBED)), "sig_b": init((1, EMBED)),
        # embed_category
        "emb": init((CLASS_NUM, EMBED)),
        # wall_enc: Linear(2, embed) -> ReLU -> Linear(embed, embed) -> ReLU
        "we_w1": init((WALL_DIM, EMBED)), "we_b1": init((1, EMBED)),
        "we_w2": init((EMBED, EMBED)), "we_b2": init((1, EMBED)),
        # init_enc: Linear(6, hidden) -> ReLU -> Linear(hidden, hidden) -> ReLU
        "ie_w1": init((STATE_DIM + SIZE_DIM, HIDDEN)), "ie_b1": init((1, HIDDEN)),
        "ie_w2": init((HIDDEN, HIDDEN)), "ie_b2": init((1, HIDDEN)),
        # mlp1_main: Linear(2*(hidden+cond), hidden) -> ReLU -> Linear(hidden, hidden)
        "m1_w1": init((2 * F_IN, HIDDEN)), "m1_b1": init((1, HIDDEN)),
        "m1_w2": init((HIDDEN, HIDDEN)), "m1_b2": init((1, HIDDEN)),
        # mlp2_main: Linear(2*hidden + 2*cond, hidden) -> ReLU -> Linear(hidden, state_dim)
        "m2_w1": init((2 * F_IN, HIDDEN)), "m2_b1": init((1, HIDDEN)),
        "m2_w2": init((HIDDEN, STATE_DIM)), "m2_b2": init((1, STATE_DIM)),
    }
    # TODO(synk): mlp1_wall/conv1_wall/mlp2_wall/conv2_wall exist in __init__ but are unused in
    # forward(), so they are intentionally not instantiated here.

    # --- batched inputs (obj_batch fields + wall_batch + t), batch stacked on axis 0 ---
    x_obj = jax.random.normal(next(ks), (BATCH, N_NODES, STATE_DIM)).astype(jnp.float32)
    geo = jax.random.normal(next(ks), (BATCH, N_NODES, SIZE_DIM)).astype(jnp.float32)
    cat = jax.random.randint(next(ks), (BATCH, N_NODES, 1), 0, CLASS_NUM).astype(jnp.int32)
    bidx = jnp.broadcast_to(
        jnp.repeat(jnp.arange(N_GRAPHS, dtype=jnp.int32),
                   N_NODES // N_GRAPHS).reshape(1, N_NODES, 1),
        (BATCH, N_NODES, 1))
    t = jax.random.uniform(next(ks), (BATCH, N_NODES, 1),
                           minval=0.1, maxval=1.0).astype(jnp.float32)
    wall = jax.random.normal(next(ks), (BATCH, N_GRAPHS, WALL_DIM)).astype(jnp.float32)

    # per-sample edges: bidirectional ring within each graph + a few random in-graph extras
    per = N_NODES // N_GRAPHS
    rng = np.random.RandomState(0)
    adj_np = np.zeros((BATCH, N_NODES, N_NODES), dtype=np.float32)
    edge_lists = []
    for b in range(BATCH):
        edges = []
        for g in range(N_GRAPHS):
            nodes = list(range(g * per, (g + 1) * per))
            k = len(nodes)
            for a in range(k):
                j, i = nodes[a], nodes[(a + 1) % k]
                edges.append((j, i))
                edges.append((i, j))
            for _ in range(2):
                j, i = rng.choice(nodes, 2, replace=False)
                edges.append((int(j), int(i)))
        e = np.array(edges, dtype=np.int32)
        adj_np[b, e[:, 1], e[:, 0]] = 1.0                 # adj[i, j]: edge j -> i
        edge_lists.append(jnp.asarray(e.T))               # [2, E]
    adj = jnp.asarray(adj_np)

    out = cond_score_forward(params, wall, x_obj, geo, cat, bidx, t, adj)
    out = jax.block_until_ready(out)

    ref = jnp.stack([
        forward_ref_single(params, wall[b], x_obj[b], geo[b], cat[b], bidx[b], t[b],
                           edge_lists[b])
        for b in range(BATCH)], axis=0)
    np.testing.assert_allclose(np.asarray(out), np.asarray(ref), rtol=2e-3, atol=2e-3)

    print("KERNEL_OK")
</pallas_src>

<mosaic_0001>
module attributes {stable_mosaic.version = 11 : i64} {
  func.func @cond_score_kernel(%arg0: i32, %arg1: memref<1x8x41xf32, #tpu.memory_space<vmem>>, %arg2: memref<1x2x2xf32, #tpu.memory_space<vmem>>, %arg3: memref<1x8x8xf32, #tpu.memory_space<vmem>>, %arg4: memref<160x32xf32, #tpu.memory_space<vmem>>, %arg5: memref<8x32xf32, #tpu.memory_space<vmem>>, %arg6: memref<2x128x64xf32, #tpu.memory_space<vmem>>, %arg7: memref<33x128xf32, #tpu.memory_space<vmem>>, %arg8: memref<1x8x128xf32, #tpu.memory_space<vmem>>) attributes {dimension_semantics = [#tpu.dimension_semantics<parallel>], iteration_bounds = array<i64: 4>, scalar_prefetch = 0 : i64, scratch_operands = 0 : i64, tpu.core_type = #tpu.core_type<tc>, window_params = [{transform_indices = @transform_0, window_bounds = array<i64: 1, 8, 41>}, {transform_indices = @transform_1, window_bounds = array<i64: 1, 2, 2>}, {transform_indices = @transform_2, window_bounds = array<i64: 1, 8, 8>}, {pipeline_mode = #tpu.pipeline_mode<synchronous>, transform_indices = @transform_3, window_bounds = array<i64: 160, 32>}, {pipeline_mode = #tpu.pipeline_mode<synchronous>, transform_indices = @transform_4, window_bounds = array<i64: 8, 32>}, {pipeline_mode = #tpu.pipeline_mode<synchronous>, transform_indices = @transform_5, window_bounds = array<i64: 2, 128, 64>}, {pipeline_mode = #tpu.pipeline_mode<synchronous>, transform_indices = @transform_6, window_bounds = array<i64: 33, 128>}, {transform_indices = @transform_7, window_bounds = array<i64: 1, 8, 128>}]} {
    %c0 = arith.constant 0 : index
    %c0_0 = arith.constant 0 : index
    %c0_1 = arith.constant 0 : index
    %0 = vector.load %arg1[%c0, %c0_0, %c0_1] : memref<1x8x41xf32, #tpu.memory_space<vmem>>, vector<1x8x41xf32>
    %1 = vector.shape_cast %0 : vector<1x8x41xf32> to vector<8x41xf32>
    %2 = vector.extract_strided_slice %1 {offsets = [0, 0], sizes = [8, 4], strides = [1, 1]} : vector<8x41xf32> to vector<8x4xf32>
    %3 = vector.extract_strided_slice %1 {offsets = [0, 4], sizes = [8, 2], strides = [1, 1]} : vector<8x41xf32> to vector<8x2xf32>
    %4 = vector.extract_strided_slice %1 {offsets = [0, 6], sizes = [8, 1], strides = [1, 1]} : vector<8x41xf32> to vector<8x1xf32>
    %5 = vector.extract_strided_slice %1 {offsets = [0, 7], sizes = [8, 32], strides = [1, 1]} : vector<8x41xf32> to vector<8x32xf32>
    %6 = vector.extract_strided_slice %1 {offsets = [0, 39], sizes = [8, 1], strides = [1, 1]} : vector<8x41xf32> to vector<8x1xf32>
    %7 = arith.fptosi %6 : vector<8x1xf32> to vector<8x1xi32>
    %8 = vector.extract_strided_slice %1 {offsets = [0, 40], sizes = [8, 1], strides = [1, 1]} : vector<8x41xf32> to vector<8x1xf32>
    %9 = arith.fptosi %8 : vector<8x1xf32> to vector<8x1xi32>
    %10 = tpu.iota {dimensions = array<i32: 1>} : vector<8x10xi32>
    %11 = vector.broadcast %7 : vector<8x1xi32> to vector<8x10xi32>
    %12 = arith.cmpi eq, %11, %10 : vector<8x10xi32>
    %13 = arith.extui %12 : vector<8x10xi1> to vector<8x10xi32>
    %14 = arith.sitofp %13 : vector<8x10xi32> to vector<8x10xf32>
    %15 = tpu.iota {dimensions = array<i32: 1>} : vector<8x2xi32>
    %16 = vector.broadcast %9 : vector<8x1xi32> to vector<8x2xi32>
    %17 = arith.cmpi eq, %16, %15 : vector<8x2xi32>
    %18 = arith.extui %17 : vector<8x2xi1> to vector<8x2xi32>
    %19 = arith.sitofp %18 : vector<8x2xi32> to vector<8x2xf32>
    %c0_2 = arith.constant 0 : index
    %c0_3 = arith.constant 0 : index
    %c0_4 = arith.constant 0 : index
    %20 = vector.load %arg3[%c0_2, %c0_3, %c0_4] : memref<1x8x8xf32, #tpu.memory_space<vmem>>, vector<1x8x8xf32>
    %21 = vector.shape_cast %20 : vector<1x8x8xf32> to vector<8x8xf32>
    %cst = arith.constant 1.000000e+00 : f32
    %22 = vector.broadcast %cst : f32 to vector<8x8xf32>
    %23 = arith.subf %21, %22 : vector<8x8xf32>
    %cst_5 = arith.constant 1.000000e+30 : f32
    %24 = vector.broadcast %cst_5 : f32 to vector<8x8xf32>
    %25 = arith.mulf %23, %24 : vector<8x8xf32>
    %c0_6 = arith.constant 0 : index
    %c0_7 = arith.constant 0 : index
    %26 = vector.load %arg4[%c0_6, %c0_7] : memref<160x32xf32, #tpu.memory_space<vmem>>, vector<160x32xf32>
    %c0_8 = arith.constant 0 : index
    %c0_9 = arith.constant 0 : index
    %27 = vector.load %arg5[%c0_8, %c0_9] : memref<8x32xf32, #tpu.memory_space<vmem>>, vector<8x32xf32>
    %c0_10 = arith.constant 0 : index
    %c0_11 = arith.constant 0 : index
    %28 = vector.load %arg7[%c0_10, %c0_11] : memref<33x128xf32, #tpu.memory_space<vmem>>, vector<33x128xf32>
    %29 = vector.extract_strided_slice %26 {offsets = [0, 0], sizes = [10, 32], strides = [1, 1]} : vector<160x32xf32> to vector<10x32xf32>
    %cst_12 = arith.constant dense<0.000000e+00> : vector<8x32xf32>
    %30 = tpu.matmul %14, %29, %cst_12 {dimension_numbers = #tpu.dot_dimension_numbers<[1], [0], [0], [1], [0, 0, 1, 1], [], []>} : vector<8x10xf32>, vector<10x32xf32>, vector<8x32xf32> -> vector<8x32xf32>
    %cst_13 = arith.constant 0.000000e+00 : f32
    %31 = vector.broadcast %cst_13 : f32 to vector<8x32xf32>
    %32 = arith.maximumf %30, %31 : vector<8x32xf32>
    %33 = vector.extract_strided_slice %26 {offsets = [16, 0], sizes = [32, 32], strides = [1, 1]} : vector<160x32xf32> to vector<32x32xf32>
    %cst_14 = arith.constant dense<0.000000e+00> : vector<8x32xf32>
    %34 = tpu.matmul %5, %33, %cst_14 {dimension_numbers = #tpu.dot_dimension_numbers<[1], [0], [0], [1], [0, 0, 1, 1], [], []>} : vector<8x32xf32>, vector<32x32xf32>, vector<8x32xf32> -> vector<8x32xf32>
    %35 = vector.extract_strided_slice %27 {offsets = [0, 0], sizes = [1, 32], strides = [1, 1]} : vector<8x32xf32> to vector<1x32xf32>
    %36 = vector.broadcast %35 : vector<1x32xf32> to vector<8x32xf32>
    %37 = arith.addf %34, %36 : vector<8x32xf32>
    %cst_15 = arith.constant 0.000000e+00 : f32
    %38 = vector.broadcast %cst_15 : f32 to vector<8x32xf32>
    %39 = arith.maximumf %37, %38 : vector<8x32xf32>
    %c0_16 = arith.constant 0 : index
    %c0_17 = arith.constant 0 : index
    %c0_18 = arith.constant 0 : index
    %40 = vector.load %arg2[%c0_16, %c0_17, %c0_18] : memref<1x2x2xf32, #tpu.memory_space<vmem>>, vector<1x2x2xf32>
    %41 = vector.shape_cast %40 : vector<1x2x2xf32> to vector<2x2xf32>
    %42 = vector.extract_strided_slice %26 {offsets = [48, 0], sizes = [2, 32], strides = [1, 1]} : vector<160x32xf32> to vector<2x32xf32>
    %cst_19 = arith.constant dense<0.000000e+00> : vector<2x32xf32>
    %43 = tpu.matmul %41, %42, %cst_19 {dimension_numbers = #tpu.dot_dimension_numbers<[1], [0], [0], [1], [0, 0, 1, 1], [], []>} : vector<2x2xf32>, vector<2x32xf32>, vector<2x32xf32> -> vector<2x32xf32>
    %44 = vector.extract_strided_slice %27 {offsets = [1, 0], sizes = [1, 32], strides = [1, 1]} : vector<8x32xf32> to vector<1x32xf32>
    %45 = vector.broadcast %44 : vector<1x32xf32> to vector<2x32xf32>
    %46 = arith.addf %43, %45 : vector<2x32xf32>
    %cst_20 = arith.constant 0.000000e+00 : f32
    %47 = vector.broadcast %cst_20 : f32 to vector<2x32xf32>
    %48 = arith.maximumf %46, %47 : vector<2x32xf32>
    %49 = vector.extract_strided_slice %26 {offsets = [56, 0], sizes = [32, 32], strides = [1, 1]} : vector<160x32xf32> to vector<32x32xf32>
    %cst_21 = arith.constant dense<0.000000e+00> : vector<2x32xf32>
    %50 = tpu.matmul %48, %49, %cst_21 {dimension_numbers = #tpu.dot_dimension_numbers<[1], [0], [0], [1], [0, 0, 1, 1], [], []>} : vector<2x32xf32>, vector<32x32xf32>, vector<2x32xf32> -> vector<2x32xf32>
    %51 = vector.extract_strided_slice %27 {offsets = [2, 0], sizes = [1, 32], strides = [1, 1]} : vector<8x32xf32> to vector<1x32xf32>
    %52 = vector.broadcast %51 : vector<1x32xf32> to vector<2x32xf32>
    %53 = arith.addf %50, %52 : vector<2x32xf32>
    %cst_22 = arith.constant 0.000000e+00 : f32
    %54 = vector.broadcast %cst_22 : f32 to vector<2x32xf32>
    %55 = arith.maximumf %53, %54 : vector<2x32xf32>
    %cst_23 = arith.constant dense<0.000000e+00> : vector<8x32xf32>
    %56 = tpu.matmul %19, %55, %cst_23 {dimension_numbers = #tpu.dot_dimension_numbers<[1], [0], [0], [1], [0, 0, 1, 1], [], []>} : vector<8x2xf32>, vector<2x32xf32>, vector<8x32xf32> -> vector<8x32xf32>
    %57 = tpu.concatenate %32, %39, %56 in 1 : vector<8x32xf32>, vector<8x32xf32>, vector<8x32xf32> -> vector<8x96xf32>
    %58 = tpu.concatenate %2, %3 in 1 : vector<8x4xf32>, vector<8x2xf32> -> vector<8x6xf32>
    %59 = vector.extract_strided_slice %26 {offsets = [88, 0], sizes = [6, 32], strides = [1, 1]} : vector<160x32xf32> to vector<6x32xf32>
    %cst_24 = arith.constant dense<0.000000e+00> : vector<8x32xf32>
    %60 = tpu.matmul %58, %59, %cst_24 {dimension_numbers = #tpu.dot_dimension_numbers<[1], [0], [0], [1], [0, 0, 1, 1], [], []>} : vector<8x6xf32>, vector<6x32xf32>, vector<8x32xf32> -> vector<8x32xf32>
    %61 = vector.extract_strided_slice %27 {offsets = [3, 0], sizes = [1, 32], strides = [1, 1]} : vector<8x32xf32> to vector<1x32xf32>
    %62 = vector.broadcast %61 : vector<1x32xf32> to vector<8x32xf32>
    %63 = arith.addf %60, %62 : vector<8x32xf32>
    %cst_25 = arith.constant 0.000000e+00 : f32
    %64 = vector.broadcast %cst_25 : f32 to vector<8x32xf32>
    %65 = arith.maximumf %63, %64 : vector<8x32xf32>
    %66 = vector.extract_strided_slice %26 {offsets = [96, 0], sizes = [32, 32], strides = [1, 1]} : vector<160x32xf32> to vector<32x32xf32>
    %cst_26 = arith.constant dense<0.000000e+00> : vector<8x32xf32>
    %67 = tpu.matmul %65, %66, %cst_26 {dimension_numbers = #tpu.dot_dimension_numbers<[1], [0], [0], [1], [0, 0, 1, 1], [], []>} : vector<8x32xf32>, vector<32x32xf32>, vector<8x32xf32> -> vector<8x32xf32>
    %68 = vector.extract_strided_slice %27 {offsets = [4, 0], sizes = [1, 32], strides = [1, 1]} : vector<8x32xf32> to vector<1x32xf32>
    %69 = vector.broadcast %68 : vector<1x32xf32> to vector<8x32xf32>
    %70 = arith.addf %67, %69 : vector<8x32xf32>
    %cst_27 = arith.constant 0.000000e+00 : f32
    %71 = vector.broadcast %cst_27 : f32 to vector<8x32xf32>
    %72 = arith.maximumf %70, %71 : vector<8x32xf32>
    %73 = tpu.concatenate %72, %57 in 1 : vector<8x32xf32>, vector<8x96xf32> -> vector<8x128xf32>
    %c0_28 = arith.constant 0 : index
    %c0_29 = arith.constant 0 : index
    %c0_30 = arith.constant 0 : index
    %74 = vector.load %arg6[%c0_28, %c0_29, %c0_30] : memref<2x128x64xf32, #tpu.memory_space<vmem>>, vector<1x128x64xf32>
    %75 = vector.shape_cast %74 : vector<1x128x64xf32> to vector<128x64xf32>
    %76 = vector.extract_strided_slice %26 {offsets = [128, 0], sizes = [32, 32], strides = [1, 1]} : vector<160x32xf32> to vector<32x32xf32>
    %77 = vector.extract_strided_slice %27 {offsets = [5, 0], sizes = [1, 32], strides = [1, 1]} : vector<8x32xf32> to vector<1x32xf32>
    %78 = vector.extract_strided_slice %27 {offsets = [6, 0], sizes = [1, 32], strides = [1, 1]} : vector<8x32xf32> to vector<1x32xf32>
    %cst_31 = arith.constant dense<0.000000e+00> : vector<8x64xf32>
    %79 = tpu.matmul %73, %75, %cst_31 {dimension_numbers = #tpu.dot_dimension_numbers<[1], [0], [0], [1], [0, 0, 1, 1], [], []>} : vector<8x128xf32>, vector<128x64xf32>, vector<8x64xf32> -> vector<8x64xf32>
    %80 = vector.extract_strided_slice %79 {offsets = [0, 0], sizes = [8, 32], strides = [1, 1]} : vector<8x64xf32> to vector<8x32xf32>
    %81 = vector.broadcast %77 : vector<1x32xf32> to vector<8x32xf32>
    %82 = arith.addf %80, %81 : vector<8x32xf32>
    %83 = vector.extract_strided_slice %79 {offsets = [0, 32], sizes = [8, 32], strides = [1, 1]} : vector<8x64xf32> to vector<8x32xf32>
    %84 = arith.subf %82, %83 : vector<8x32xf32>
    %85 = vector.shape_cast %84 : vector<8x32xf32> to vector<8x1x32xf32>
    %86 = vector.shape_cast %83 : vector<8x32xf32> to vector<1x8x32xf32>
    %87 = vector.broadcast %85 : vector<8x1x32xf32> to vector<8x8x32xf32>
    %88 = vector.broadcast %86 : vector<1x8x32xf32> to vector<8x8x32xf32>
    %89 = arith.addf %87, %88 : vector<8x8x32xf32>
    %cst_32 = arith.constant 0.000000e+00 : f32
    %90 = vector.broadcast %cst_32 : f32 to vector<8x8x32xf32>
    %91 = arith.maximumf %89, %90 : vector<8x8x32xf32>
    %92 = vector.shape_cast %91 : vector<8x8x32xf32> to vector<64x32xf32>
    %cst_33 = arith.constant dense<0.000000e+00> : vector<64x32xf32>
    %93 = tpu.matmul %92, %76, %cst_33 {dimension_numbers = #tpu.dot_dimension_numbers<[1], [0], [0], [1], [0, 0, 1, 1], [], []>} : vector<64x32xf32>, vector<32x32xf32>, vector<64x32xf32> -> vector<64x32xf32>
    %94 = vector.shape_cast %93 : vector<64x32xf32> to vector<8x8x32xf32>
    %95 = vector.shape_cast %78 : vector<1x32xf32> to vector<1x1x32xf32>
    %96 = vector.broadcast %95 : vector<1x1x32xf32> to vector<8x8x32xf32>
    %97 = arith.addf %94, %96 : vector<8x8x32xf32>
    %98 = vector.shape_cast %25 : vector<8x8xf32> to vector<8x8x1xf32>
    %99 = vector.broadcast %98 : vector<8x8x1xf32> to vector<8x8x32xf32>
    %100 = arith.addf %97, %99 : vector<8x8x32xf32>
    %cst_34 = arith.constant dense<0xFF800000> : vector<8x32xf32>
    %101 = vector.multi_reduction <maximumf>, %100, %cst_34 [1] : vector<8x8x32xf32> to vector<8x32xf32>
    %cst_35 = arith.constant 0.000000e+00 : f32
    %102 = vector.broadcast %cst_35 : f32 to vector<8x32xf32>
    %103 = arith.maximumf %101, %102 : vector<8x32xf32>
    %104 = tpu.concatenate %103, %57 in 1 : vector<8x32xf32>, vector<8x96xf32> -> vector<8x128xf32>
    %c1 = arith.constant 1 : index
    %c0_36 = arith.constant 0 : index
    %c0_37 = arith.constant 0 : index
    %105 = vector.load %arg6[%c1, %c0_36, %c0_37] : memref<2x128x64xf32, #tpu.memory_space<vmem>>, vector<1x128x64xf32>
    %106 = vector.shape_cast %105 : vector<1x128x64xf32> to vector<128x64xf32>
    %107 = vector.extract_strided_slice %28 {offsets = [0, 0], sizes = [32, 128], strides = [1, 1]} : vector<33x128xf32> to vector<32x128xf32>
    %108 = vector.extract_strided_slice %27 {offsets = [7, 0], sizes = [1, 32], strides = [1, 1]} : vector<8x32xf32> to vector<1x32xf32>
    %109 = vector.extract_strided_slice %28 {offsets = [32, 0], sizes = [1, 128], strides = [1, 1]} : vector<33x128xf32> to vector<1x128xf32>
    %cst_38 = arith.constant dense<0.000000e+00> : vector<8x64xf32>
    %110 = tpu.matmul %104, %106, %cst_38 {dimension_numbers = #tpu.dot_dimension_numbers<[1], [0], [0], [1], [0, 0, 1, 1], [], []>} : vector<8x128xf32>, vector<128x64xf32>, vector<8x64xf32> -> vector<8x64xf32>
    %111 = vector.extract_strided_slice %110 {offsets = [0, 0], sizes = [8, 32], strides = [1, 1]} : vector<8x64xf32> to vector<8x32xf32>
    %112 = vector.broadcast %108 : vector<1x32xf32> to vector<8x32xf32>
    %113 = arith.addf %111, %112 : vector<8x32xf32>
    %114 = vector.extract_strided_slice %110 {offsets = [0, 32], sizes = [8, 32], strides = [1, 1]} : vector<8x64xf32> to vector<8x32xf32>
    %115 = arith.subf %113, %114 : vector<8x32xf32>
    %116 = vector.shape_cast %115 : vector<8x32xf32> to vector<8x1x32xf32>
    %117 = vector.shape_cast %114 : vector<8x32xf32> to vector<1x8x32xf32>
    %118 = vector.broadcast %116 : vector<8x1x32xf32> to vector<8x8x32xf32>
    %119 = vector.broadcast %117 : vector<1x8x32xf32> to vector<8x8x32xf32>
    %120 = arith.addf %118, %119 : vector<8x8x32xf32>
    %cst_39 = arith.constant 0.000000e+00 : f32
    %121 = vector.broadcast %cst_39 : f32 to vector<8x8x32xf32>
    %122 = arith.maximumf %120, %121 : vector<8x8x32xf32>
    %123 = vector.shape_cast %122 : vector<8x8x32xf32> to vector<64x32xf32>
    %cst_40 = arith.constant dense<0.000000e+00> : vector<64x128xf32>
    %124 = tpu.matmul %123, %107, %cst_40 {dimension_numbers = #tpu.dot_dimension_numbers<[1], [0], [0], [1], [0, 0, 1, 1], [], []>} : vector<64x32xf32>, vector<32x128xf32>, vector<64x128xf32> -> vector<64x128xf32>
    %125 = vector.shape_cast %124 : vector<64x128xf32> to vector<8x8x128xf32>
    %126 = vector.shape_cast %109 : vector<1x128xf32> to vector<1x1x128xf32>
    %127 = vector.broadcast %126 : vector<1x1x128xf32> to vector<8x8x128xf32>
    %128 = arith.addf %125, %127 : vector<8x8x128xf32>
    %129 = vector.shape_cast %25 : vector<8x8xf32> to vector<8x8x1xf32>
    %130 = vector.broadcast %129 : vector<8x8x1xf32> to vector<8x8x128xf32>
    %131 = arith.addf %128, %130 : vector<8x8x128xf32>
    %cst_41 = arith.constant dense<0xFF800000> : vector<8x128xf32>
    %132 = vector.multi_reduction <maximumf>, %131, %cst_41 [1] : vector<8x8x128xf32> to vector<8x128xf32>
    %cst_42 = arith.constant 2.000000e+00 : f32
    %133 = vector.broadcast %cst_42 : f32 to vector<8x1xf32>
    %134 = arith.mulf %133, %4 : vector<8x1xf32>
    %cst_43 = arith.constant 3.21887589 : f32
    %135 = vector.broadcast %cst_43 : f32 to vector<8x1xf32>
    %136 = arith.mulf %134, %135 : vector<8x1xf32>
    %137 = math.exp %136 : vector<8x1xf32>
    %cst_44 = arith.constant 1.000000e+00 : f32
    %138 = vector.broadcast %cst_44 : f32 to vector<8x1xf32>
    %139 = arith.subf %137, %138 : vector<8x1xf32>
    %cst_45 = arith.constant 6.43775177 : f32
    %140 = vector.broadcast %cst_45 : f32 to vector<8x1xf32>
    %141 = arith.divf %139, %140 : vector<8x1xf32>
    %142 = math.sqrt %141 : vector<8x1xf32>
    %cst_46 = arith.constant 1.000000e-07 : f32
    %143 = vector.broadcast %cst_46 : f32 to vector<8x1xf32>
    %144 = arith.addf %142, %143 : vector<8x1xf32>
    %145 = vector.broadcast %144 : vector<8x1xf32> to vector<8x128xf32>
    %146 = arith.divf %132, %145 : vector<8x128xf32>
    %c0_47 = arith.constant 0 : index
    %c0_48 = arith.constant 0 : index
    %c0_49 = arith.constant 0 : index
    %147 = vector.load %arg8[%c0_47, %c0_48, %c0_49] : memref<1x8x128xf32, #tpu.memory_space<vmem>>, vector<1x8x128xf32>
    %148 = vector.shape_cast %147 : vector<1x8x128xf32> to vector<8x128xf32>
    %149 = vector.shape_cast %146 : vector<8x128xf32> to vector<1x8x128xf32>
    tpu.vector_store %arg8[%c0_47, %c0_48, %c0_49], %149 {strides = array<i32>} : memref<1x8x128xf32, #tpu.memory_space<vmem>>, vector<1x8x128xf32>,
    return
  }
  func.func @transform_0(%arg0: i32) -> (i32, i32, i32) {
    %c0_i32 = arith.constant 0 : i32
    %c0_i32_0 = arith.constant 0 : i32
    %c0_i32_1 = arith.constant 0 : i32
    return %arg0, %c0_i32, %c0_i32_0 : i32, i32, i32
  }
  func.func @transform_1(%arg0: i32) -> (i32, i32, i32) {
    %c0_i32 = arith.constant 0 : i32
    %c0_i32_0 = arith.constant 0 : i32
    %c0_i32_1 = arith.constant 0 : i32
    return %arg0, %c0_i32, %c0_i32_0 : i32, i32, i32
  }
  func.func @transform_2(%arg0: i32) -> (i32, i32, i32) {
    %c0_i32 = arith.constant 0 : i32
    %c0_i32_0 = arith.constant 0 : i32
    %c0_i32_1 = arith.constant 0 : i32
    return %arg0, %c0_i32, %c0_i32_0 : i32, i32, i32
  }
  func.func @transform_3(%arg0: i32) -> (i32, i32) {
    %c0_i32 = arith.constant 0 : i32
    %c0_i32_0 = arith.constant 0 : i32
    %c0_i32_1 = arith.constant 0 : i32
    return %c0_i32, %c0_i32_0 : i32, i32
  }
  func.func @transform_4(%arg0: i32) -> (i32, i32) {
    %c0_i32 = arith.constant 0 : i32
    %c0_i32_0 = arith.constant 0 : i32
    %c0_i32_1 = arith.constant 0 : i32
    return %c0_i32, %c0_i32_0 : i32, i32
  }
  func.func @transform_5(%arg0: i32) -> (i32, i32, i32) {
    %c0_i32 = arith.constant 0 : i32
    %c0_i32_0 = arith.constant 0 : i32
    %c0_i32_1 = arith.constant 0 : i32
    %c0_i32_2 = arith.constant 0 : i32
    return %c0_i32, %c0_i32_0, %c0_i32_1 : i32, i32, i32
  }
  func.func @transform_6(%arg0: i32) -> (i32, i32) {
    %c0_i32 = arith.constant 0 : i32
    %c0_i32_0 = arith.constant 0 : i32
    %c0_i32_1 = arith.constant 0 : i32
    return %c0_i32, %c0_i32_0 : i32, i32
  }
  func.func @transform_7(%arg0: i32) -> (i32, i32, i32) {
    %c0_i32 = arith.constant 0 : i32
    %c0_i32_0 = arith.constant 0 : i32
    %c0_i32_1 = arith.constant 0 : i32
    return %arg0, %c0_i32, %c0_i32_0 : i32, i32, i32
  }
}

</mosaic_0001>

<llo_original>
// kernel: cond_score_forward.1
$region0: #{cond_score_forward.1}
  #allocation0 [shape = 'u32[]', space=smem, size = 0x4, offset = 0x4, fixed_abs, tag = 'smem constant byte address 0x4 - core index']
  #allocation1 [shape = 'u32[144,128]{1,0:T(1,128)}', space=vmem, size = 0x12000, scoped, tag = 'internal scratch']
  %s0 = inlined_call_operand.vmem [shape: f32[4,8,41], index: 0, kind: input, shape index: {}]
  %s1 = inlined_call_operand.vmem [shape: f32[4,2,2], index: 1, kind: input, shape index: {}]
  %s2 = inlined_call_operand.vmem [shape: f32[4,8,8], index: 2, kind: input, shape index: {}]
  %s3 = inlined_call_operand.vmem [shape: f32[160,32], index: 3, kind: input, shape index: {}]
  %s4 = inlined_call_operand.vmem [shape: f32[8,32], index: 4, kind: input, shape index: {}]
  %s5 = inlined_call_operand.vmem [shape: f32[2,128,64], index: 5, kind: input, shape index: {}]
  %s6 = inlined_call_operand.vmem [shape: f32[33,128], index: 6, kind: input, shape index: {}]
  %s7 = inlined_call_operand.vmem [shape: f32[4,8,128], index: 7, kind: output, shape index: {}]
  %s8 = sld [smem:[#allocation0]]
  $region61: #{cond_score_forward.1} parent=0
    _
  %s10 = ssub.s32 1, %s8
  %s11 = scalar_select 0, %s10, %s8
  loop: start=0, step=1, limit=6
  $region2: #{cond_score_forward.1} parent=0 // loop_pre_header
    _
  $region3: #{cond_score_forward.1} parent=0 // loop_header
    %s13 = sphi 0, %s17
    %p14 = scmp.ge.s32.totalorder %s13, 6
    %s23 = sphi 0, %s25
    %s26 = sphi 0, %s23
    %s27 = sphi 0, %s26
    %s43 = sphi 0, %s27
    %s49 = sphi 0, %s51
    %s52 = sphi 0, %s49
    %s53 = sphi 0, %s52
    %s69 = sphi 0, %s53
    %s75 = sphi 0, %s77
    %s78 = sphi 0, %s75
    %s79 = sphi 0, %s78
    %s95 = sphi 0, %s79
    %s99 = sphi 0, %s99
    %s101 = sphi 0, %s99
    %s102 = sphi 0, %s101
    %s116 = sphi 0, %s102
    %s120 = sphi 0, %s120
    %s122 = sphi 0, %s120
    %s123 = sphi 0, %s122
    %s137 = sphi 0, %s123
    %s141 = sphi 0, %s141
    %s143 = sphi 0, %s141
    %s144 = sphi 0, %s143
    %s158 = sphi 0, %s144
    %s162 = sphi 0, %s162
    %s164 = sphi 0, %s162
    %s165 = sphi 0, %s164
    %s179 = sphi 0, %s165
    %s185 = sphi 0, %s187
    %s188 = sphi 0, %s185
    %s189 = sphi 0, %s188
    %s205 = sphi 0, %s189
  $region4: #{cond_score_forward.1} parent=0 // loop_header_branch
    %16 = sbr.rel (%p14) target = $region8
  $region5: #{cond_score_forward.1} parent=0 // loop_body
    %s18 = ssub.s32 %s13, 1
    %s19 = ssub.s32 %s13, 2
    %s20 = sadd.s32 %s13, 1
    %s21 = ssub.s32 %s13, %s20
    %p22 = scmp.eq.s32.totalorder %s21, 0
    %s24 = sadd.s32 %s23, 1
    %s25 = scalar_select %p22, %s23, %s24
    %p28 = pneg %p22
    %p29 = scmp.eq.s32.totalorder %s13, 3
    %p30 = por %p28, %p29
    %p31 = scmp.ne.s32.totalorder %s23, %s26
    %p32 = scmp.eq.s32.totalorder %s13, 0
    %p33 = por %p31, %p32
    %p34 = scmp.ne.s32.totalorder %s23, %s26
    %p35 = scmp.eq.s32.totalorder %s18, 3
    %p36 = por %p34, %p35
    %p37 = scmp.ne.s32.totalorder %s26, %s27
    %p38 = scmp.eq.s32.totalorder %s18, 0
    %p39 = por %p37, %p38
    %p40 = scmp.ne.s32.totalorder %s26, %s27
    %p41 = scmp.eq.s32.totalorder %s19, 3
    %p42 = por %p40, %p41
    %p44 = scmp.ne.s32.totalorder %s27, %s43
    %p45 = scmp.eq.s32.totalorder %s19, 0
    %p46 = por %p44, %p45
    %s47 = ssub.s32 %s13, %s20
    %p48 = scmp.eq.s32.totalorder %s47, 0
    %s50 = sadd.s32 %s49, 1
    %s51 = scalar_select %p48, %s49, %s50
    %p54 = pneg %p48
    %p55 = scmp.eq.s32.totalorder %s13, 3
    %p56 = por %p54, %p55
    %p57 = scmp.ne.s32.totalorder %s49, %s52
    %p58 = scmp.eq.s32.totalorder %s13, 0
    %p59 = por %p57, %p58
    %p60 = scmp.ne.s32.totalorder %s49, %s52
    %p61 = scmp.eq.s32.totalorder %s18, 3
    %p62 = por %p60, %p61
    %p63 = scmp.ne.s32.totalorder %s52, %s53
    %p64 = scmp.eq.s32.totalorder %s18, 0
    %p65 = por %p63, %p64
    %p66 = scmp.ne.s32.totalorder %s52, %s53
    %p67 = scmp.eq.s32.totalorder %s19, 3
    %p68 = por %p66, %p67
    %p70 = scmp.ne.s32.totalorder %s53, %s69
    %p71 = scmp.eq.s32.totalorder %s19, 0
    %p72 = por %p70, %p71
    %s73 = ssub.s32 %s13, %s20
    %p74 = scmp.eq.s32.totalorder %s73, 0
    %s76 = sadd.s32 %s75, 1
    %s77 = scalar_select %p74, %s75, %s76
    %p80 = pneg %p74
    %p81 = scmp.eq.s32.totalorder %s13, 3
    %p82 = por %p80, %p81
    %p83 = scmp.ne.s32.totalorder %s75, %s78
    %p84 = scmp.eq.s32.totalorder %s13, 0
    %p85 = por %p83, %p84
    %p86 = scmp.ne.s32.totalorder %s75, %s78
    %p87 = scmp.eq.s32.totalorder %s18, 3
    %p88 = por %p86, %p87
    %p89 = scmp.ne.s32.totalorder %s78, %s79
    %p90 = scmp.eq.s32.totalorder %s18, 0
    %p91 = por %p89, %p90
    %p92 = scmp.ne.s32.totalorder %s78, %s79
    %p93 = scmp.eq.s32.totalorder %s19, 3
    %p94 = por %p92, %p93
    %p96 = scmp.ne.s32.totalorder %s79, %s95
    %p97 = scmp.eq.s32.totalorder %s19, 0
    %p98 = por %p96, %p97
    %s100 = sadd.s32 %s99, 1
    %p103 = scmp.eq.s32.totalorder %s13, 3
    %p104 = scmp.ne.s32.totalorder %s99, %s101
    %p105 = scmp.eq.s32.totalorder %s13, 0
    %p106 = por %p104, %p105
    %p107 = scmp.ne.s32.totalorder %s99, %s101
    %p108 = scmp.eq.s32.totalorder %s18, 3
    %p109 = por %p107, %p108
    %p110 = scmp.ne.s32.totalorder %s101, %s102
    %p111 = scmp.eq.s32.totalorder %s18, 0
    %p112 = por %p110, %p111
    %p113 = scmp.ne.s32.totalorder %s101, %s102
    %p114 = scmp.eq.s32.totalorder %s19, 3
    %p115 = por %p113, %p114
    %p117 = scmp.ne.s32.totalorder %s102, %s116
    %p118 = scmp.eq.s32.totalorder %s19, 0
    %p119 = por %p117, %p118
    %s121 = sadd.s32 %s120, 1
    %p124 = scmp.eq.s32.totalorder %s13, 3
    %p125 = scmp.ne.s32.totalorder %s120, %s122
    %p126 = scmp.eq.s32.totalorder %s13, 0
    %p127 = por %p125, %p126
    %p128 = scmp.ne.s32.totalorder %s120, %s122
    %p129 = scmp.eq.s32.totalorder %s18, 3
    %p130 = por %p128, %p129
    %p131 = scmp.ne.s32.totalorder %s122, %s123
    %p132 = scmp.eq.s32.totalorder %s18, 0
    %p133 = por %p131, %p132
    %p134 = scmp.ne.s32.totalorder %s122, %s123
    %p135 = scmp.eq.s32.totalorder %s19, 3
    %p136 = por %p134, %p135
    %p138 = scmp.ne.s32.totalorder %s123, %s137
    %p139 = scmp.eq.s32.totalorder %s19, 0
    %p140 = por %p138, %p139
    %s142 = sadd.s32 %s141, 1
    %p145 = scmp.eq.s32.totalorder %s13, 3
    %p146 = scmp.ne.s32.totalorder %s141, %s143
    %p147 = scmp.eq.s32.totalorder %s13, 0
    %p148 = por %p146, %p147
    %p149 = scmp.ne.s32.totalorder %s141, %s143
    %p150 = scmp.eq.s32.totalorder %s18, 3
    %p151 = por %p149, %p150
    %p152 = scmp.ne.s32.totalorder %s143, %s144
    %p153 = scmp.eq.s32.totalorder %s18, 0
    %p154 = por %p152, %p153
    %p155 = scmp.ne.s32.totalorder %s143, %s144
    %p156 = scmp.eq.s32.totalorder %s19, 3
    %p157 = por %p155, %p156
    %p159 = scmp.ne.s32.totalorder %s144, %s158
    %p160 = scmp.eq.s32.totalorder %s19, 0
    %p161 = por %p159, %p160
    %s163 = sadd.s32 %s162, 1
    %p166 = scmp.eq.s32.totalorder %s13, 3
    %p167 = scmp.ne.s32.totalorder %s162, %s164
    %p168 = scmp.eq.s32.totalorder %s13, 0
    %p169 = por %p167, %p168
    %p170 = scmp.ne.s32.totalorder %s162, %s164
    %p171 = scmp.eq.s32.totalorder %s18, 3
    %p172 = por %p170, %p171
    %p173 = scmp.ne.s32.totalorder %s164, %s165
    %p174 = scmp.eq.s32.totalorder %s18, 0
    %p175 = por %p173, %p174
    %p176 = scmp.ne.s32.totalorder %s164, %s165
    %p177 = scmp.eq.s32.totalorder %s19, 3
    %p178 = por %p176, %p177
    %p180 = scmp.ne.s32.totalorder %s165, %s179
    %p181 = scmp.eq.s32.totalorder %s19, 0
    %p182 = por %p180, %p181
    %s183 = ssub.s32 %s13, %s20
    %p184 = scmp.eq.s32.totalorder %s183, 0
    %s186 = sadd.s32 %s185, 1
    %s187 = scalar_select %p184, %s185, %s186
    %p190 = pneg %p184
    %p191 = scmp.eq.s32.totalorder %s13, 3
    %p192 = por %p190, %p191
    %p193 = scmp.ne.s32.totalorder %s185, %s188
    %p194 = scmp.eq.s32.totalorder %s13, 0
    %p195 = por %p193, %p194
    %p196 = scmp.ne.s32.totalorder %s185, %s188
    %p197 = scmp.eq.s32.totalorder %s18, 3
    %p198 = por %p196, %p197
    %p199 = scmp.ne.s32.totalorder %s188, %s189
    %p200 = scmp.eq.s32.totalorder %s18, 0
    %p201 = por %p199, %p200
    %p202 = scmp.ne.s32.totalorder %s188, %s189
    %p203 = scmp.eq.s32.totalorder %s19, 3
    %p204 = por %p202, %p203
    %p206 = scmp.ne.s32.totalorder %s189, %s205
    %p207 = scmp.eq.s32.totalorder %s19, 0
    %p208 = por %p206, %p207
    %p209 = scmp.le.s32.totalorder 1, %s13
    %p210 = scmp.lt.s32.totalorder %s13, 5
    %p211 = pnand %p209, %p210
    %p212 = pneg %p211
    // Predicated region
    $region9: #{cond_score_forward.1} parent=5 // pred_check
      _
    $region10: #{cond_score_forward.1} parent=5 // pred_check_branch
      %214 = sbr.rel (%p211) target = $region12
    $region11: #{cond_score_forward.1} parent=5 // pred_region
      %s215 = ssub.s32 %s13, 1
      // Predicated region
      $region13: #{cond_score_forward.1} parent=11 // pred_check
        %p216 = pneg %p112
      $region14: #{cond_score_forward.1} parent=11 // pred_check_branch
        %218 = sbr.rel (%p216) target = $region16
      $region15: #{cond_score_forward.1} parent=11 // pred_region
        _
      $region16: #{cond_score_forward.1} parent=11 // pred_fallthru
        _
      // Predicated region
      $region17: #{cond_score_forward.1} parent=11 // pred_check
        %p219 = pneg %p133
      $region18: #{cond_score_forward.1} parent=11 // pred_check_branch
        %221 = sbr.rel (%p219) target = $region20
      $region19: #{cond_score_forward.1} parent=11 // pred_region
        _
      $region20: #{cond_score_forward.1} parent=11 // pred_fallthru
        _
      // Predicated region
      $region21: #{cond_score_forward.1} parent=11 // pred_check
        %p222 = pneg %p154
      $region22: #{cond_score_forward.1} parent=11 // pred_check_branch
        %224 = sbr.rel (%p222) target = $region24
      $region23: #{cond_score_forward.1} parent=11 // pred_region
        _
      $region24: #{cond_score_forward.1} parent=11 // pred_fallthru
        _
      // Predicated region
      $region25: #{cond_score_forward.1} parent=11 // pred_check
        %p225 = pneg %p175
      $region26: #{cond_score_forward.1} parent=11 // pred_check_branch
        %227 = sbr.rel (%p225) target = $region28
      $region27: #{cond_score_forward.1} parent=11 // pred_region
        _
      $region28: #{cond_score_forward.1} parent=11 // pred_fallthru
        _
    $region12: #{cond_score_forward.1} parent=5 // pred_fallthru
      _
    %p228 = scmp.lt.s32.totalorder %s13, 4
    // Predicated region
    $region29: #{cond_score_forward.1} parent=5 // pred_check
      %p229 = pneg %p228
    $region30: #{cond_score_forward.1} parent=5 // pred_check_branch
      %231 = sbr.rel (%p229) target = $region32
    $region31: #{cond_score_forward.1} parent=5 // pred_region
      // Predicated region
      $region33: #{cond_score_forward.1} parent=31 // pred_check
        %p232 = pneg %p33
      $region34: #{cond_score_forward.1} parent=31 // pred_check_branch
        %234 = sbr.rel (%p232) target = $region36
      $region35: #{cond_score_forward.1} parent=31 // pred_region
        %p235 = scmp.lt.s32.totalorder %s13, 3
        %s236 = scalar_select %p235, %s13, 3
        %s237 = smul.addr %s236, 8
        %s238 = scalar_lea.vmem %s0, %s237
      $region36: #{cond_score_forward.1} parent=31 // pred_fallthru
        _
      // Predicated region
      $region37: #{cond_score_forward.1} parent=31 // pred_check
        %p239 = pneg %p59
      $region38: #{cond_score_forward.1} parent=31 // pred_check_branch
        %241 = sbr.rel (%p239) target = $region40
      $region39: #{cond_score_forward.1} parent=31 // pred_region
        %p242 = scmp.lt.s32.totalorder %s13, 3
        %s243 = scalar_select %p242, %s13, 3
        %s244 = smul.addr %s243, 2
        %s245 = scalar_lea.vmem %s1, %s244
      $region40: #{cond_score_forward.1} parent=31 // pred_fallthru
        _
      // Predicated region
      $region41: #{cond_score_forward.1} parent=31 // pred_check
        %p246 = pneg %p85
      $region42: #{cond_score_forward.1} parent=31 // pred_check_branch
        %248 = sbr.rel (%p246) target = $region44
      $region43: #{cond_score_forward.1} parent=31 // pred_region
        %p249 = scmp.lt.s32.totalorder %s13, 3
        %s250 = scalar_select %p249, %s13, 3
        %s251 = smul.addr %s250, 8
        %s252 = scalar_lea.vmem %s2, %s251
      $region44: #{cond_score_forward.1} parent=31 // pred_fallthru
        _
    $region32: #{cond_score_forward.1} parent=5 // pred_fallthru
      _
    %p253 = scmp.le.s32.totalorder 1, %s13
    %p254 = scmp.lt.s32.totalorder %s13, 5
    %p255 = pnand %p253, %p254
    %p256 = pneg %p255
    // Predicated region
    $region45: #{cond_score_forward.1} parent=5 // pred_check
      _
    $region46: #{cond_score_forward.1} parent=5 // pred_check_branch
      %258 = sbr.rel (%p255) target = $region48
    $region47: #{cond_score_forward.1} parent=5 // pred_region
      %s259 = ssub.s32 %s13, 1
      %p260 = scmp.lt.s32.totalorder %s18, 3
      %s261 = scalar_select %p260, %s18, 3
      %s262 = smul.addr %s261, 8
      %s263 = scalar_lea.vmem %s0, %s262
      %p264 = pneg %p39
      %p265 = pneg %p36
      %p266 = scmp.lt.s32.totalorder %s18, 3
      %s267 = scalar_select %p266, %s18, 3
      %s268 = smul.addr %s267, 2
      %s269 = scalar_lea.vmem %s1, %s268
      %p270 = pneg %p65
      %p271 = pneg %p62
      %p272 = scmp.lt.s32.totalorder %s18, 3
      %s273 = scalar_select %p272, %s18, 3
      %s274 = smul.addr %s273, 8
      %s275 = scalar_lea.vmem %s2, %s274
      %p276 = pneg %p91
      %p277 = pneg %p88
      %p278 = pneg %p112
      %p279 = pneg %p109
      %p280 = pneg %p133
      %p281 = pneg %p130
      %p282 = pneg %p154
      %p283 = pneg %p151
      %p284 = pneg %p175
      %p285 = pneg %p172
      %p286 = pneg %p201
      %p287 = pneg %p198
      %p288 = scmp.lt.s32.totalorder %s18, 3
      %s289 = scalar_select %p288, %s18, 3
      %s290 = smul.addr %s289, 8
      %s291 = scalar_lea.vmem %s7, %s290
      %p292 = scmp.lt.s32.totalorder %s18, 3
      %s293 = scalar_select %p292, %s18, 3
      %s294 = smul.addr %s293, 8
      %s295 = scalar_lea.vmem %s0, %s294
      %p296 = scmp.lt.s32.totalorder %s18, 3
      %s297 = scalar_select %p296, %s18, 3
      %s298 = smul.addr %s297, 2
      %s299 = scalar_lea.vmem %s1, %s298
      %p300 = scmp.lt.s32.totalorder %s18, 3
      %s301 = scalar_select %p300, %s18, 3
      %s302 = smul.addr %s301, 8
      %s303 = scalar_lea.vmem %s2, %s302
      %p304 = scmp.lt.s32.totalorder %s18, 3
      %s305 = scalar_select %p304, %s18, 3
      %s306 = smul.addr %s305, 8
      %s307 = scalar_lea.vmem %s7, %s306
      %v308 = vld [vmem:[%s295] sm:$0xff]
      %v309 = vcvt.f32.s32.to.zero.pseudo %v308
      %v310 = vlaneseq
      %v311 = vand.u32 %v310, 127
      %312 = vset.pattern.permute.xlu0 39
      %313 = vperm.xlu0 %312, %v309
      %v314 = vpop.permute.xlu0 %313
      %vm315 = vcmp.eq.s32.totalorder %v314, %v311
      %v316 = vsel %vm315, 1, 0
      %v317 = vcvt.s32.f32 %v316
      %318 = vset.pattern.permute.xlu0 40
      %319 = vperm.xlu0 %318, %v309
      %v320 = vpop.permute.xlu0 %319
      %vm321 = vcmp.eq.s32.totalorder %v320, %v311
      %v322 = vsel %vm321, 1, 0
      %v323 = vcvt.s32.f32 %v322
      %v324 = vld [vmem:[%s303] sm:$0xff]
      %v325 = vsub.f32 %v324, 1.0
      %v326 = vmul.f32 %v325, 1e+30
      %v327 = vld [vmem:[%s3] sm:$0xff]
      %v328 = vld [vmem:[%s3 + $0x8] sm:$0xff]
      %v329 = vld [vmem:[%s3 + $0x10] sm:$0xff]
      %v330 = vld [vmem:[%s3 + $0x18] sm:$0xff]
      %v331 = vld [vmem:[%s3 + $0x20] sm:$0xff]
      %v332 = vld [vmem:[%s3 + $0x28] sm:$0xff]
      %v333 = vld [vmem:[%s3 + $0x30] sm:$0xff]
      %v334 = vld [vmem:[%s3 + $0x38] sm:$0xff]
      %v335 = vld [vmem:[%s3 + $0x40] sm:$0xff]
      %v336 = vld [vmem:[%s3 + $0x48] sm:$0xff]
      %v337 = vld [vmem:[%s3 + $0x50] sm:$0xff]
      %v338 = vld [vmem:[%s3 + $0x58] sm:$0xff]
      %v339 = vld [vmem:[%s3 + $0x60] sm:$0xff]
      %v340 = vld [vmem:[%s3 + $0x68] sm:$0xff]
      %v341 = vld [vmem:[%s3 + $0x70] sm:$0xff]
      %v342 = vld [vmem:[%s3 + $0x78] sm:$0xff]
      %v343 = vld [vmem:[%s3 + $0x80] sm:$0xff]
      %v344 = vld [vmem:[%s3 + $0x88] sm:$0xff]
      %v345 = vld [vmem:[%s3 + $0x90] sm:$0xff]
      %v346 = vld [vmem:[%s3 + $0x98] sm:$0xff]
      %v347 = vld [vmem:[%s4] sm:$0xff]
      %v348 = vld [vmem:[%s6] sm:$0xff]
      %v349 = vld [vmem:[%s6 + $0x8] sm:$0xff]
      %v350 = vld [vmem:[%s6 + $0x10] sm:$0xff]
      %v351 = vld [vmem:[%s6 + $0x18] sm:$0xff]
      %v352 = vld [vmem:[%s6 + $0x20] sm:$0x1]
      %vm353 = vcmask 80896
      %v355 = vsel %vm353, %v317, 0
      %vm357 = vcmask 1041408
      %v359 = vsel %vm357, %v328, 0
      %361 = vmatprep.subr.mxu0 0.0
      %362 = vmatpush1.msra.mxu0 0.0
      %363 = vmatprep.subr.mxu0 0.0
      %364 = vmatpush1.msra.mxu0 0.0
      %365 = vmatprep.subr.mxu0 0.0
      %366 = vmatpush1.msra.mxu0 0.0
      %367 = vmatprep.subr.mxu0 0.0
      %368 = vmatpush1.msra.mxu0 0.0
      %369 = vmatprep.subr.mxu0 0.0
      %370 = vmatpush1.msra.mxu0 0.0
      %371 = vmatprep.subr.mxu0 0.0
      %372 = vmatpush1.msra.mxu0 0.0
      %373 = vmatprep.subr.mxu0 0.0
      %374 = vmatpush1.msra.mxu0 0.0
      %375 = vmatprep.subr.mxu0 0.0
      %376 = vmatpush1.msra.mxu0 0.0
      %377 = vmatprep.subr.mxu0 0.0
      %378 = vmatpush1.msra.mxu0 0.0
      %379 = vmatprep.subr.mxu0 0.0
      %380 = vmatpush1.msra.mxu0 0.0
      %381 = vmatprep.subr.mxu0 0.0
      %382 = vmatpush1.msra.mxu0 0.0
      %383 = vmatprep.subr.mxu0 0.0
      %384 = vmatpush1.msra.mxu0 0.0
      %385 = vmatprep.subr.mxu0 0.0
      %386 = vmatpush1.msra.mxu0 0.0
      %387 = vmatprep.subr.mxu0 0.0
      %388 = vmatpush1.msra.mxu0 0.0
      %389 = vmatprep.subr.mxu0 0.0
      %390 = vmatpush1.msra.mxu0 %v359
      %391 = vmatprep.subr.mxu0 0.0
      %392 = vmatpush1.msra.mxu0 %v327
      %393 = vmatprep.subr.mxu0 0.0
      %394 = vmatpush2.msra.mxu0 0.0
      %395 = vmatprep.subr.mxu0 0.0
      %396 = vmatpush2.msra.mxu0 0.0
      %397 = vmatprep.subr.mxu0 0.0
      %398 = vmatpush2.msra.mxu0 0.0
      %399 = vmatprep.subr.mxu0 0.0
      %400 = vmatpush2.msra.mxu0 0.0
      %401 = vmatprep.subr.mxu0 0.0
      %402 = vmatpush2.msra.mxu0 0.0
      %403 = vmatprep.subr.mxu0 0.0
      %404 = vmatpush2.msra.mxu0 0.0
      %405 = vmatprep.subr.mxu0 0.0
      %406 = vmatpush2.msra.mxu0 0.0
      %407 = vmatprep.subr.mxu0 0.0
      %408 = vmatpush2.msra.mxu0 0.0
      %409 = vmatprep.subr.mxu0 0.0
      %410 = vmatpush2.msra.mxu0 0.0
      %411 = vmatprep.subr.mxu0 0.0
      %412 = vmatpush2.msra.mxu0 0.0
      %413 = vmatprep.subr.mxu0 0.0
      %414 = vmatpush2.msra.mxu0 0.0
      %415 = vmatprep.subr.mxu0 0.0
      %416 = vmatpush2.msra.mxu0 0.0
      %417 = vmatprep.subr.mxu0 0.0
      %418 = vmatpush2.msra.mxu0 0.0
      %419 = vmatprep.subr.mxu0 0.0
      %420 = vmatpush2.msra.mxu0 0.0
      %421 = vmatprep.subr.mxu0 0.0
      %422 = vmatpush2.msra.mxu0 0.0
      %423 = vmatprep.subr.mxu0 0.0
      %424 = vmatpush2.msra.mxu0 0.0
      %425 = vmatprep.mubr.f32.mxu0 0.0
      %426 = vmatmul.mubr.f32.gmra.mxu0 %v355
      %v427 = vpop.f32.mrf.mxu0
      %v428 = vadd.f32 0.0, %v427
      %v429 = vpop.f32.mrf.mxu0
      %430 = vdwg.mxu0
      %v431 = vmax.f32 %v428, 0.0
      %v432 = vlaneseq
      %v433 = vshrl.u32 %v432, 7
      %v434 = vsub.s32 0, %v433
      %v435 = vrot.slane %v347, %v434
      %437 = vrot.lane.b32.xlu0 %v308, 121
      %v438 = vpop.permute.xlu0 %437
      %vm439 = vcmask 261120
      %v440 = vsel %vm439, %v438, 0
      %442 = vmatprep.subr.mxu0 0.0
      %443 = vmatpush1.msra.mxu0 0.0
      %444 = vmatprep.subr.mxu0 0.0
      %445 = vmatpush1.msra.mxu0 0.0
      %446 = vmatprep.subr.mxu0 0.0
      %447 = vmatpush1.msra.mxu0 0.0
      %448 = vmatprep.subr.mxu0 0.0
      %449 = vmatpush1.msra.mxu0 0.0
      %450 = vmatprep.subr.mxu0 0.0
      %451 = vmatpush1.msra.mxu0 0.0
      %452 = vmatprep.subr.mxu0 0.0
      %453 = vmatpush1.msra.mxu0 0.0
      %454 = vmatprep.subr.mxu0 0.0
      %455 = vmatpush1.msra.mxu0 0.0
      %456 = vmatprep.subr.mxu0 0.0
      %457 = vmatpush1.msra.mxu0 0.0
      %458 = vmatprep.subr.mxu0 0.0
      %459 = vmatpush1.msra.mxu0 0.0
      %460 = vmatprep.subr.mxu0 0.0
      %461 = vmatpush1.msra.mxu0 0.0
      %462 = vmatprep.subr.mxu0 0.0
      %463 = vmatpush1.msra.mxu0 0.0
      %464 = vmatprep.subr.mxu0 0.0
      %465 = vmatpush1.msra.mxu0 0.0
      %466 = vmatprep.subr.mxu0 0.0
      %467 = vmatpush1.msra.mxu0 %v332
      %468 = vmatprep.subr.mxu0 0.0
      %469 = vmatpush1.msra.mxu0 %v331
      %470 = vmatprep.subr.mxu0 0.0
      %471 = vmatpush1.msra.mxu0 %v330
      %472 = vmatprep.subr.mxu0 0.0
      %473 = vmatpush1.msra.mxu0 %v329
      %474 = vmatprep.subr.mxu0 0.0
      %475 = vmatpush2.msra.mxu0 0.0
      %476 = vmatprep.subr.mxu0 0.0
      %477 = vmatpush2.msra.mxu0 0.0
      %478 = vmatprep.subr.mxu0 0.0
      %479 = vmatpush2.msra.mxu0 0.0
      %480 = vmatprep.subr.mxu0 0.0
      %481 = vmatpush2.msra.mxu0 0.0
      %482 = vmatprep.subr.mxu0 0.0
      %483 = vmatpush2.msra.mxu0 0.0
      %484 = vmatprep.subr.mxu0 0.0
      %485 = vmatpush2.msra.mxu0 0.0
      %486 = vmatprep.subr.mxu0 0.0
      %487 = vmatpush2.msra.mxu0 0.0
      %488 = vmatprep.subr.mxu0 0.0
      %489 = vmatpush2.msra.mxu0 0.0
      %490 = vmatprep.subr.mxu0 0.0
      %491 = vmatpush2.msra.mxu0 0.0
      %492 = vmatprep.subr.mxu0 0.0
      %493 = vmatpush2.msra.mxu0 0.0
      %494 = vmatprep.subr.mxu0 0.0
      %495 = vmatpush2.msra.mxu0 0.0
      %496 = vmatprep.subr.mxu0 0.0
      %497 = vmatpush2.msra.mxu0 0.0
      %498 = vmatprep.subr.mxu0 0.0
      %499 = vmatpush2.msra.mxu0 0.0
      %500 = vmatprep.subr.mxu0 0.0
      %501 = vmatpush2.msra.mxu0 0.0
      %502 = vmatprep.subr.mxu0 0.0
      %503 = vmatpush2.msra.mxu0 0.0
      %504 = vmatprep.subr.mxu0 0.0
      %505 = vmatpush2.msra.mxu0 0.0
      %506 = vmatprep.mubr.f32.mxu0 0.0
      %507 = vmatmul.mubr.f32.gmra.mxu0 %v440
      %v508 = vpop.f32.mrf.mxu0
      %v509 = vadd.f32 %v435, %v508
      %v510 = vpop.f32.mrf.mxu0
      %511 = vdwg.mxu0
      %v512 = vmax.f32 %v509, 0.0
      %v513 = vld [vmem:[%s299] sm:$0x3]
      %v514 = vlaneseq
      %v515 = vshrl.u32 %v514, 7
      %v516 = vsub.s32 1, %v515
      %v517 = vrot.slane %v347, %v516
      %vm518 = vcmask 15360
      %v520 = vsel %vm518, %v513, 0
      %v523 = vsel %vm357, %v333, 0
      %525 = vmatprep.subr.mxu0 0.0
      %526 = vmatpush1.msra.mxu0 0.0
      %527 = vmatprep.subr.mxu0 0.0
      %528 = vmatpush1.msra.mxu0 0.0
      %529 = vmatprep.subr.mxu0 0.0
      %530 = vmatpush1.msra.mxu0 0.0
      %531 = vmatprep.subr.mxu0 0.0
      %532 = vmatpush1.msra.mxu0 0.0
      %533 = vmatprep.subr.mxu0 0.0
      %534 = vmatpush1.msra.mxu0 0.0
      %535 = vmatprep.subr.mxu0 0.0
      %536 = vmatpush1.msra.mxu0 0.0
      %537 = vmatprep.subr.mxu0 0.0
      %538 = vmatpush1.msra.mxu0 0.0
      %539 = vmatprep.subr.mxu0 0.0
      %540 = vmatpush1.msra.mxu0 0.0
      %541 = vmatprep.subr.mxu0 0.0
      %542 = vmatpush1.msra.mxu0 0.0
      %543 = vmatprep.subr.mxu0 0.0
      %544 = vmatpush1.msra.mxu0 0.0
      %545 = vmatprep.subr.mxu0 0.0
      %546 = vmatpush1.msra.mxu0 0.0
      %547 = vmatprep.subr.mxu0 0.0
      %548 = vmatpush1.msra.mxu0 0.0
      %549 = vmatprep.subr.mxu0 0.0
      %550 = vmatpush1.msra.mxu0 0.0
      %551 = vmatprep.subr.mxu0 0.0
      %552 = vmatpush1.msra.mxu0 0.0
      %553 = vmatprep.subr.mxu0 0.0
      %554 = vmatpush1.msra.mxu0 0.0
      %555 = vmatprep.subr.mxu0 0.0
      %556 = vmatpush1.msra.mxu0 %v523
      %557 = vmatprep.subr.mxu0 0.0
      %558 = vmatpush2.msra.mxu0 0.0
      %559 = vmatprep.subr.mxu0 0.0
      %560 = vmatpush2.msra.mxu0 0.0
      %561 = vmatprep.subr.mxu0 0.0
      %562 = vmatpush2.msra.mxu0 0.0
      %563 = vmatprep.subr.mxu0 0.0
      %564 = vmatpush2.msra.mxu0 0.0
      %565 = vmatprep.subr.mxu0 0.0
      %566 = vmatpush2.msra.mxu0 0.0
      %567 = vmatprep.subr.mxu0 0.0
      %568 = vmatpush2.msra.mxu0 0.0
      %569 = vmatprep.subr.mxu0 0.0
      %570 = vmatpush2.msra.mxu0 0.0
      %571 = vmatprep.subr.mxu0 0.0
      %572 = vmatpush2.msra.mxu0 0.0
      %573 = vmatprep.subr.mxu0 0.0
      %574 = vmatpush2.msra.mxu0 0.0
      %575 = vmatprep.subr.mxu0 0.0
      %576 = vmatpush2.msra.mxu0 0.0
      %577 = vmatprep.subr.mxu0 0.0
      %578 = vmatpush2.msra.mxu0 0.0
      %579 = vmatprep.subr.mxu0 0.0
      %580 = vmatpush2.msra.mxu0 0.0
      %581 = vmatprep.subr.mxu0 0.0
      %582 = vmatpush2.msra.mxu0 0.0
      %583 = vmatprep.subr.mxu0 0.0
      %584 = vmatpush2.msra.mxu0 0.0
      %585 = vmatprep.subr.mxu0 0.0
      %586 = vmatpush2.msra.mxu0 0.0
      %587 = vmatprep.subr.mxu0 0.0
      %588 = vmatpush2.msra.mxu0 0.0
      %589 = vmatprep.mubr.f32.mxu0 0.0
      %590 = vmatmul.mubr.f32.gmra.mxu0 %v520
      %v591 = vpop.f32.mrf.mxu0
      %v592 = vadd.f32 %v517, %v591
      %v593 = vpop.f32.mrf.mxu0
      %594 = vdwg.mxu0
      %v595 = vmax.f32 %v592, 0.0
      %v596 = vlaneseq
      %v597 = vshrl.u32 %v596, 7
      %v598 = vsub.s32 2, %v597
      %v599 = vrot.slane %v347, %v598
      %v601 = vsel %vm439, %v595, 0
      %603 = vmatprep.subr.mxu0 0.0
      %604 = vmatpush1.msra.mxu0 0.0
      %605 = vmatprep.subr.mxu0 0.0
      %606 = vmatpush1.msra.mxu0 0.0
      %607 = vmatprep.subr.mxu0 0.0
      %608 = vmatpush1.msra.mxu0 0.0
      %609 = vmatprep.subr.mxu0 0.0
      %610 = vmatpush1.msra.mxu0 0.0
      %611 = vmatprep.subr.mxu0 0.0
      %612 = vmatpush1.msra.mxu0 0.0
      %613 = vmatprep.subr.mxu0 0.0
      %614 = vmatpush1.msra.mxu0 0.0
      %615 = vmatprep.subr.mxu0 0.0
      %616 = vmatpush1.msra.mxu0 0.0
      %617 = vmatprep.subr.mxu0 0.0
      %618 = vmatpush1.msra.mxu0 0.0
      %619 = vmatprep.subr.mxu0 0.0
      %620 = vmatpush1.msra.mxu0 0.0
      %621 = vmatprep.subr.mxu0 0.0
      %622 = vmatpush1.msra.mxu0 0.0
      %623 = vmatprep.subr.mxu0 0.0
      %624 = vmatpush1.msra.mxu0 0.0
      %625 = vmatprep.subr.mxu0 0.0
      %626 = vmatpush1.msra.mxu0 0.0
      %627 = vmatprep.subr.mxu0 0.0
      %628 = vmatpush1.msra.mxu0 %v337
      %629 = vmatprep.subr.mxu0 0.0
      %630 = vmatpush1.msra.mxu0 %v336
      %631 = vmatprep.subr.mxu0 0.0
      %632 = vmatpush1.msra.mxu0 %v335
      %633 = vmatprep.subr.mxu0 0.0
      %634 = vmatpush1.msra.mxu0 %v334
      %635 = vmatprep.subr.mxu0 0.0
      %636 = vmatpush2.msra.mxu0 0.0
      %637 = vmatprep.subr.mxu0 0.0
      %638 = vmatpush2.msra.mxu0 0.0
      %639 = vmatprep.subr.mxu0 0.0
      %640 = vmatpush2.msra.mxu0 0.0
      %641 = vmatprep.subr.mxu0 0.0
      %642 = vmatpush2.msra.mxu0 0.0
      %643 = vmatprep.subr.mxu0 0.0
      %644 = vmatpush2.msra.mxu0 0.0
      %645 = vmatprep.subr.mxu0 0.0
      %646 = vmatpush2.msra.mxu0 0.0
      %647 = vmatprep.subr.mxu0 0.0
      %648 = vmatpush2.msra.mxu0 0.0
      %649 = vmatprep.subr.mxu0 0.0
      %650 = vmatpush2.msra.mxu0 0.0
      %651 = vmatprep.subr.mxu0 0.0
      %652 = vmatpush2.msra.mxu0 0.0
      %653 = vmatprep.subr.mxu0 0.0
      %654 = vmatpush2.msra.mxu0 0.0
      %655 = vmatprep.subr.mxu0 0.0
      %656 = vmatpush2.msra.mxu0 0.0
      %657 = vmatprep.subr.mxu0 0.0
      %658 = vmatpush2.msra.mxu0 0.0
      %659 = vmatprep.subr.mxu0 0.0
      %660 = vmatpush2.msra.mxu0 0.0
      %661 = vmatprep.subr.mxu0 0.0
      %662 = vmatpush2.msra.mxu0 0.0
      %663 = vmatprep.subr.mxu0 0.0
      %664 = vmatpush2.msra.mxu0 0.0
      %665 = vmatprep.subr.mxu0 0.0
      %666 = vmatpush2.msra.mxu0 0.0
      %667 = vmatprep.mubr.f32.mxu0 0.0
      %668 = vmatmul.mubr.f32.gmra.mxu0 %v601
      %v669 = vpop.f32.mrf.mxu0
      %v670 = vadd.f32 %v599, %v669
      %v671 = vpop.f32.mrf.mxu0
      %672 = vdwg.mxu0
      %v673 = vmax.f32 %v670, 0.0
      %v675 = vsel %vm518, %v323, 0
      %v678 = vsel %vm357, %v673, 0
      %680 = vmatprep.subr.mxu0 0.0
      %681 = vmatpush1.msra.mxu0 0.0
      %682 = vmatprep.subr.mxu0 0.0
      %683 = vmatpush1.msra.mxu0 0.0
      %684 = vmatprep.subr.mxu0 0.0
      %685 = vmatpush1.msra.mxu0 0.0
      %686 = vmatprep.subr.mxu0 0.0
      %687 = vmatpush1.msra.mxu0 0.0
      %688 = vmatprep.subr.mxu0 0.0
      %689 = vmatpush1.msra.mxu0 0.0
      %690 = vmatprep.subr.mxu0 0.0
      %691 = vmatpush1.msra.mxu0 0.0
      %692 = vmatprep.subr.mxu0 0.0
      %693 = vmatpush1.msra.mxu0 0.0
      %694 = vmatprep.subr.mxu0 0.0
      %695 = vmatpush1.msra.mxu0 0.0
      %696 = vmatprep.subr.mxu0 0.0
      %697 = vmatpush1.msra.mxu0 0.0
      %698 = vmatprep.subr.mxu0 0.0
      %699 = vmatpush1.msra.mxu0 0.0
      %700 = vmatprep.subr.mxu0 0.0
      %701 = vmatpush1.msra.mxu0 0.0
      %702 = vmatprep.subr.mxu0 0.0
      %703 = vmatpush1.msra.mxu0 0.0
      %704 = vmatprep.subr.mxu0 0.0
      %705 = vmatpush1.msra.mxu0 0.0
      %706 = vmatprep.subr.mxu0 0.0
      %707 = vmatpush1.msra.mxu0 0.0
      %708 = vmatprep.subr.mxu0 0.0
      %709 = vmatpush1.msra.mxu0 0.0
      %710 = vmatprep.subr.mxu0 0.0
      %711 = vmatpush1.msra.mxu0 %v678
      %712 = vmatprep.subr.mxu0 0.0
      %713 = vmatpush2.msra.mxu0 0.0
      %714 = vmatprep.subr.mxu0 0.0
      %715 = vmatpush2.msra.mxu0 0.0
      %716 = vmatprep.subr.mxu0 0.0
      %717 = vmatpush2.msra.mxu0 0.0
      %718 = vmatprep.subr.mxu0 0.0
      %719 = vmatpush2.msra.mxu0 0.0
      %720 = vmatprep.subr.mxu0 0.0
      %721 = vmatpush2.msra.mxu0 0.0
      %722 = vmatprep.subr.mxu0 0.0
      %723 = vmatpush2.msra.mxu0 0.0
      %724 = vmatprep.subr.mxu0 0.0
      %725 = vmatpush2.msra.mxu0 0.0
      %726 = vmatprep.subr.mxu0 0.0
      %727 = vmatpush2.msra.mxu0 0.0
      %728 = vmatprep.subr.mxu0 0.0
      %729 = vmatpush2.msra.mxu0 0.0
      %730 = vmatprep.subr.mxu0 0.0
      %731 = vmatpush2.msra.mxu0 0.0
      %732 = vmatprep.subr.mxu0 0.0
      %733 = vmatpush2.msra.mxu0 0.0
      %734 = vmatprep.subr.mxu0 0.0
      %735 = vmatpush2.msra.mxu0 0.0
      %736 = vmatprep.subr.mxu0 0.0
      %737 = vmatpush2.msra.mxu0 0.0
      %738 = vmatprep.subr.mxu0 0.0
      %739 = vmatpush2.msra.mxu0 0.0
      %740 = vmatprep.subr.mxu0 0.0
      %741 = vmatpush2.msra.mxu0 0.0
      %742 = vmatprep.subr.mxu0 0.0
      %743 = vmatpush2.msra.mxu0 0.0
      %744 = vmatprep.mubr.f32.mxu0 0.0
      %745 = vmatmul.mubr.f32.gmra.mxu0 %v675
      %v746 = vpop.f32.mrf.mxu0
      %v747 = vadd.f32 0.0, %v746
      %v748 = vpop.f32.mrf.mxu0
      %749 = vdwg.mxu0
      %751 = vrot.lane.b32.xlu0 %v512, 32
      %v752 = vpop.permute.xlu0 %751
      %755 = vrot.lane.b32.xlu0 %v747, 64
      %v756 = vpop.permute.xlu0 %755
      %v758 = vsel %vm439, %v431, %v752
      %vm759 = vcmask 523264
      %v760 = vsel %vm759, %v758, %v756
      %v761 = vlaneseq
      %v762 = vshrl.u32 %v761, 7
      %v763 = vsub.s32 3, %v762
      %v764 = vrot.slane %v347, %v763
      %vm765 = vcmask 48128
      %v766 = vsel %vm765, %v308, 0
      %vm768 = vcmask 1045504
      %v770 = vsel %vm768, %v338, 0
      %772 = vmatprep.subr.mxu0 0.0
      %773 = vmatpush1.msra.mxu0 0.0
      %774 = vmatprep.subr.mxu0 0.0
      %775 = vmatpush1.msra.mxu0 0.0
      %776 = vmatprep.subr.mxu0 0.0
      %777 = vmatpush1.msra.mxu0 0.0
      %778 = vmatprep.subr.mxu0 0.0
      %779 = vmatpush1.msra.mxu0 0.0
      %780 = vmatprep.subr.mxu0 0.0
      %781 = vmatpush1.msra.mxu0 0.0
      %782 = vmatprep.subr.mxu0 0.0
      %783 = vmatpush1.msra.mxu0 0.0
      %784 = vmatprep.subr.mxu0 0.0
      %785 = vmatpush1.msra.mxu0 0.0
      %786 = vmatprep.subr.mxu0 0.0
      %787 = vmatpush1.msra.mxu0 0.0
      %788 = vmatprep.subr.mxu0 0.0
      %789 = vmatpush1.msra.mxu0 0.0
      %790 = vmatprep.subr.mxu0 0.0
      %791 = vmatpush1.msra.mxu0 0.0
      %792 = vmatprep.subr.mxu0 0.0
      %793 = vmatpush1.msra.mxu0 0.0
      %794 = vmatprep.subr.mxu0 0.0
      %795 = vmatpush1.msra.mxu0 0.0
      %796 = vmatprep.subr.mxu0 0.0
      %797 = vmatpush1.msra.mxu0 0.0
      %798 = vmatprep.subr.mxu0 0.0
      %799 = vmatpush1.msra.mxu0 0.0
      %800 = vmatprep.subr.mxu0 0.0
      %801 = vmatpush1.msra.mxu0 0.0
      %802 = vmatprep.subr.mxu0 0.0
      %803 = vmatpush1.msra.mxu0 %v770
      %804 = vmatprep.subr.mxu0 0.0
      %805 = vmatpush2.msra.mxu0 0.0
      %806 = vmatprep.subr.mxu0 0.0
      %807 = vmatpush2.msra.mxu0 0.0
      %808 = vmatprep.subr.mxu0 0.0
      %809 = vmatpush2.msra.mxu0 0.0
      %810 = vmatprep.subr.mxu0 0.0
      %811 = vmatpush2.msra.mxu0 0.0
      %812 = vmatprep.subr.mxu0 0.0
      %813 = vmatpush2.msra.mxu0 0.0
      %814 = vmatprep.subr.mxu0 0.0
      %815 = vmatpush2.msra.mxu0 0.0
      %816 = vmatprep.subr.mxu0 0.0
      %817 = vmatpush2.msra.mxu0 0.0
      %818 = vmatprep.subr.mxu0 0.0
      %819 = vmatpush2.msra.mxu0 0.0
      %820 = vmatprep.subr.mxu0 0.0
      %821 = vmatpush2.msra.mxu0 0.0
      %822 = vmatprep.subr.mxu0 0.0
      %823 = vmatpush2.msra.mxu0 0.0
      %824 = vmatprep.subr.mxu0 0.0
      %825 = vmatpush2.msra.mxu0 0.0
      %826 = vmatprep.subr.mxu0 0.0
      %827 = vmatpush2.msra.mxu0 0.0
      %828 = vmatprep.subr.mxu0 0.0
      %829 = vmatpush2.msra.mxu0 0.0
      %830 = vmatprep.subr.mxu0 0.0
      %831 = vmatpush2.msra.mxu0 0.0
      %832 = vmatprep.subr.mxu0 0.0
      %833 = vmatpush2.msra.mxu0 0.0
      %834 = vmatprep.subr.mxu0 0.0
      %835 = vmatpush2.msra.mxu0 0.0
      %836 = vmatprep.mubr.f32.mxu0 0.0
      %837 = vmatmul.mubr.f32.gmra.mxu0 %v766
      %v838 = vpop.f32.mrf.mxu0
      %v839 = vadd.f32 %v764, %v838
      %v840 = vpop.f32.mrf.mxu0
      %841 = vdwg.mxu0
      %v842 = vmax.f32 %v839, 0.0
      %v843 = vlaneseq
      %v844 = vshrl.u32 %v843, 7
      %v845 = vsub.s32 4, %v844
      %v846 = vrot.slane %v347, %v845
      %v848 = vsel %vm439, %v842, 0
      %850 = vmatprep.subr.mxu0 0.0
      %851 = vmatpush1.msra.mxu0 0.0
      %852 = vmatprep.subr.mxu0 0.0
      %853 = vmatpush1.msra.mxu0 0.0
      %854 = vmatprep.subr.mxu0 0.0
      %855 = vmatpush1.msra.mxu0 0.0
      %856 = vmatprep.subr.mxu0 0.0
      %857 = vmatpush1.msra.mxu0 0.0
      %858 = vmatprep.subr.mxu0 0.0
      %859 = vmatpush1.msra.mxu0 0.0
      %860 = vmatprep.subr.mxu0 0.0
      %861 = vmatpush1.msra.mxu0 0.0
      %862 = vmatprep.subr.mxu0 0.0
      %863 = vmatpush1.msra.mxu0 0.0
      %864 = vmatprep.subr.mxu0 0.0
      %865 = vmatpush1.msra.mxu0 0.0
      %866 = vmatprep.subr.mxu0 0.0
      %867 = vmatpush1.msra.mxu0 0.0
      %868 = vmatprep.subr.mxu0 0.0
      %869 = vmatpush1.msra.mxu0 0.0
      %870 = vmatprep.subr.mxu0 0.0
      %871 = vmatpush1.msra.mxu0 0.0
      %872 = vmatprep.subr.mxu0 0.0
      %873 = vmatpush1.msra.mxu0 0.0
      %874 = vmatprep.subr.mxu0 0.0
      %875 = vmatpush1.msra.mxu0 %v342
      %876 = vmatprep.subr.mxu0 0.0
      %877 = vmatpush1.msra.mxu0 %v341
      %878 = vmatprep.subr.mxu0 0.0
      %879 = vmatpush1.msra.mxu0 %v340
      %880 = vmatprep.subr.mxu0 0.0
      %881 = vmatpush1.msra.mxu0 %v339
      %882 = vmatprep.subr.mxu0 0.0
      %883 = vmatpush2.msra.mxu0 0.0
      %884 = vmatprep.subr.mxu0 0.0
      %885 = vmatpush2.msra.mxu0 0.0
      %886 = vmatprep.subr.mxu0 0.0
      %887 = vmatpush2.msra.mxu0 0.0
      %888 = vmatprep.subr.mxu0 0.0
      %889 = vmatpush2.msra.mxu0 0.0
      %890 = vmatprep.subr.mxu0 0.0
      %891 = vmatpush2.msra.mxu0 0.0
      %892 = vmatprep.subr.mxu0 0.0
      %893 = vmatpush2.msra.mxu0 0.0
      %894 = vmatprep.subr.mxu0 0.0
      %895 = vmatpush2.msra.mxu0 0.0
      %896 = vmatprep.subr.mxu0 0.0
      %897 = vmatpush2.msra.mxu0 0.0
      %898 = vmatprep.subr.mxu0 0.0
      %899 = vmatpush2.msra.mxu0 0.0
      %900 = vmatprep.subr.mxu0 0.0
      %901 = vmatpush2.msra.mxu0 0.0
      %902 = vmatprep.subr.mxu0 0.0
      %903 = vmatpush2.msra.mxu0 0.0
      %904 = vmatprep.subr.mxu0 0.0
      %905 = vmatpush2.msra.mxu0 0.0
      %906 = vmatprep.subr.mxu0 0.0
      %907 = vmatpush2.msra.mxu0 0.0
      %908 = vmatprep.subr.mxu0 0.0
      %909 = vmatpush2.msra.mxu0 0.0
      %910 = vmatprep.subr.mxu0 0.0
      %911 = vmatpush2.msra.mxu0 0.0
      %912 = vmatprep.subr.mxu0 0.0
      %913 = vmatpush2.msra.mxu0 0.0
      %914 = vmatprep.mubr.f32.mxu0 0.0
      %915 = vmatmul.mubr.f32.gmra.mxu0 %v848
      %v916 = vpop.f32.mrf.mxu0
      %v917 = vadd.f32 %v846, %v916
      %v918 = vpop.f32.mrf.mxu0
      %919 = vdwg.mxu0
      %v920 = vmax.f32 %v917, 0.0
      %922 = vrot.lane.b32.xlu0 %v760, 32
      %v923 = vpop.permute.xlu0 %922
      %v925 = vsel %vm439, %v920, %v923
      %v926 = vld [vmem:[%s5] sm:$0xff]
      %v927 = vld [vmem:[%s5 + $0x8] sm:$0xff]
      %v928 = vld [vmem:[%s5 + $0x10] sm:$0xff]
      %v929 = vld [vmem:[%s5 + $0x18] sm:$0xff]
      %v930 = vld [vmem:[%s5 + $0x20] sm:$0xff]
      %v931 = vld [vmem:[%s5 + $0x28] sm:$0xff]
      %v932 = vld [vmem:[%s5 + $0x30] sm:$0xff]
      %v933 = vld [vmem:[%s5 + $0x38] sm:$0xff]
      %v934 = vld [vmem:[%s5 + $0x40] sm:$0xff]
      %v935 = vld [vmem:[%s5 + $0x48] sm:$0xff]
      %v936 = vld [vmem:[%s5 + $0x50] sm:$0xff]
      %v937 = vld [vmem:[%s5 + $0x58] sm:$0xff]
      %v938 = vld [vmem:[%s5 + $0x60] sm:$0xff]
      %v939 = vld [vmem:[%s5 + $0x68] sm:$0xff]
      %v940 = vld [vmem:[%s5 + $0x70] sm:$0xff]
      %v941 = vld [vmem:[%s5 + $0x78] sm:$0xff]
      %942 = vmatprep.subr.mxu0 0.0
      %943 = vmatpush1.msra.mxu0 %v941
      %944 = vmatprep.subr.mxu0 0.0
      %945 = vmatpush1.msra.mxu0 %v940
      %946 = vmatprep.subr.mxu0 0.0
      %947 = vmatpush1.msra.mxu0 %v939
      %948 = vmatprep.subr.mxu0 0.0
      %949 = vmatpush1.msra.mxu0 %v938
      %950 = vmatprep.subr.mxu0 0.0
      %951 = vmatpush1.msra.mxu0 %v937
      %952 = vmatprep.subr.mxu0 0.0
      %953 = vmatpush1.msra.mxu0 %v936
      %954 = vmatprep.subr.mxu0 0.0
      %955 = vmatpush1.msra.mxu0 %v935
      %956 = vmatprep.subr.mxu0 0.0
      %957 = vmatpush1.msra.mxu0 %v934
      %958 = vmatprep.subr.mxu0 0.0
      %959 = vmatpush1.msra.mxu0 %v933
      %960 = vmatprep.subr.mxu0 0.0
      %961 = vmatpush1.msra.mxu0 %v932
      %962 = vmatprep.subr.mxu0 0.0
      %963 = vmatpush1.msra.mxu0 %v931
      %964 = vmatprep.subr.mxu0 0.0
      %965 = vmatpush1.msra.mxu0 %v930
      %966 = vmatprep.subr.mxu0 0.0
      %967 = vmatpush1.msra.mxu0 %v929
      %968 = vmatprep.subr.mxu0 0.0
      %969 = vmatpush1.msra.mxu0 %v928
      %970 = vmatprep.subr.mxu0 0.0
      %971 = vmatpush1.msra.mxu0 %v927
      %972 = vmatprep.subr.mxu0 0.0
      %973 = vmatpush1.msra.mxu0 %v926
      %974 = vmatprep.subr.mxu0 0.0
      %975 = vmatpush2.msra.mxu0 0.0
      %976 = vmatprep.subr.mxu0 0.0
      %977 = vmatpush2.msra.mxu0 0.0
      %978 = vmatprep.subr.mxu0 0.0
      %979 = vmatpush2.msra.mxu0 0.0
      %980 = vmatprep.subr.mxu0 0.0
      %981 = vmatpush2.msra.mxu0 0.0
      %982 = vmatprep.subr.mxu0 0.0
      %983 = vmatpush2.msra.mxu0 0.0
      %984 = vmatprep.subr.mxu0 0.0
      %985 = vmatpush2.msra.mxu0 0.0
      %986 = vmatprep.subr.mxu0 0.0
      %987 = vmatpush2.msra.mxu0 0.0
      %988 = vmatprep.subr.mxu0 0.0
      %989 = vmatpush2.msra.mxu0 0.0
      %990 = vmatprep.subr.mxu0 0.0
      %991 = vmatpush2.msra.mxu0 0.0
      %992 = vmatprep.subr.mxu0 0.0
      %993 = vmatpush2.msra.mxu0 0.0
      %994 = vmatprep.subr.mxu0 0.0
      %995 = vmatpush2.msra.mxu0 0.0
      %996 = vmatprep.subr.mxu0 0.0
      %997 = vmatpush2.msra.mxu0 0.0
      %998 = vmatprep.subr.mxu0 0.0
      %999 = vmatpush2.msra.mxu0 0.0
      %1000 = vmatprep.subr.mxu0 0.0
      %1001 = vmatpush2.msra.mxu0 0.0
      %1002 = vmatprep.subr.mxu0 0.0
      %1003 = vmatpush2.msra.mxu0 0.0
      %1004 = vmatprep.subr.mxu0 0.0
      %1005 = vmatpush2.msra.mxu0 0.0
      %1006 = vmatprep.mubr.f32.mxu0 0.0
      %1007 = vmatmul.mubr.f32.gmra.mxu0 %v925
      %v1008 = vpop.f32.mrf.mxu0
      %v1009 = vadd.f32 0.0, %v1008
      %v1010 = vpop.f32.mrf.mxu0
      %1011 = vdwg.mxu0
      %v1012 = vlaneseq
      %v1013 = vshrl.u32 %v1012, 7
      %v1014 = vsub.s32 5, %v1013
      %v1015 = vrot.slane %v347, %v1014
      %v1016 = vadd.f32 %v1009, %v1015
      %1018 = vrot.lane.b32.xlu0 %v1009, 96
      %v1019 = vpop.permute.xlu0 %1018
      %v1021 = vsub.f32 %v1016, %v1019
      %v1023 = vcombine.high %v1021, %v1021
      %v1025 = vunpack.c.l.s4 1966171168
      %v1026 = vunpack.c.0.s8 %v1025
      %v1027 = vlaneseq
      %v1028 = vshrl.u32 %v1027, 7
      %v1029 = vsub.s32 %v1026, %v1028
      %v1030 = vrot.slane %v1021, %v1029
      %v1032 = vunpack.c.l.s4 1966171168
      %v1033 = vunpack.c.0.s8 %v1032
      %v1034 = vlaneseq
      %v1035 = vshrl.u32 %v1034, 7
      %v1036 = vsub.s32 %v1033, %v1035
      %v1037 = vrot.slane %v1023, %v1036
      %v1038 = vcombine.high %v1030, %v1030
      %v1039 = vcombine.high %v1037, %v1037
      %v1041 = vunpack.c.l.s4 1966171168
      %v1042 = vunpack.c.0.s8 %v1041
      %v1043 = vlaneseq
      %v1044 = vshrl.u32 %v1043, 7
      %v1045 = vsub.s32 %v1042, %v1044
      %v1046 = vrot.slane %v1030, %v1045
      %v1048 = vunpack.c.l.s4 1966171168
      %v1049 = vunpack.c.0.s8 %v1048
      %v1050 = vlaneseq
      %v1051 = vshrl.u32 %v1050, 7
      %v1052 = vsub.s32 %v1049, %v1051
      %v1053 = vrot.slane %v1037, %v1052
      %v1055 = vunpack.c.l.s4 1966171168
      %v1056 = vunpack.c.0.s8 %v1055
      %v1057 = vlaneseq
      %v1058 = vshrl.u32 %v1057, 7
      %v1059 = vsub.s32 %v1056, %v1058
      %v1060 = vrot.slane %v1038, %v1059
      %v1062 = vunpack.c.l.s4 1966171168
      %v1063 = vunpack.c.0.s8 %v1062
      %v1064 = vlaneseq
      %v1065 = vshrl.u32 %v1064, 7
      %v1066 = vsub.s32 %v1063, %v1065
      %v1067 = vrot.slane %v1039, %v1066
      %v1068 = vcombine.high %v1046, %v1046
      %v1069 = vcombine.high %v1053, %v1053
      %v1070 = vcombine.high %v1060, %v1060
      %v1071 = vcombine.high %v1067, %v1067
      %v1072 = vlaneseq
      %v1073 = vshrl.u32 %v1072, 7
      %v1074 = vsub.s32 0, %v1073
      %v1075 = vrot.slane %v1046, %v1074
      %v1076 = vlaneseq
      %v1077 = vshrl.u32 %v1076, 7
      %v1078 = vsub.s32 0, %v1077
      %v1079 = vrot.slane %v1060, %v1078
      %v1080 = vlaneseq
      %v1081 = vshrl.u32 %v1080, 7
      %v1082 = vsub.s32 0, %v1081
      %v1083 = vrot.slane %v1068, %v1082
      %v1084 = vlaneseq
      %v1085 = vshrl.u32 %v1084, 7
      %v1086 = vsub.s32 0, %v1085
      %v1087 = vrot.slane %v1070, %v1086
      %v1088 = vlaneseq
      %v1089 = vshrl.u32 %v1088, 7
      %v1090 = vsub.s32 0, %v1089
      %v1091 = vrot.slane %v1053, %v1090
      %v1092 = vlaneseq
      %v1093 = vshrl.u32 %v1092, 7
      %v1094 = vsub.s32 0, %v1093
      %v1095 = vrot.slane %v1067, %v1094
      %v1096 = vlaneseq
      %v1097 = vshrl.u32 %v1096, 7
      %v1098 = vsub.s32 0, %v1097
      %v1099 = vrot.slane %v1069, %v1098
      %v1100 = vlaneseq
      %v1101 = vshrl.u32 %v1100, 7
      %v1102 = vsub.s32 0, %v1101
      %v1103 = vrot.slane %v1071, %v1102
      %v1112 = vadd.f32 %v1075, %v1019
      %v1113 = vadd.f32 %v1079, %v1019
      %v1114 = vadd.f32 %v1083, %v1019
      %v1115 = vadd.f32 %v1087, %v1019
      %v1116 = vadd.f32 %v1091, %v1019
      %v1117 = vadd.f32 %v1095, %v1019
      %v1118 = vadd.f32 %v1099, %v1019
      %v1119 = vadd.f32 %v1103, %v1019
      %v1120 = vmax.f32 %v1112, 0.0
      %v1121 = vmax.f32 %v1113, 0.0
      %v1122 = vmax.f32 %v1114, 0.0
      %v1123 = vmax.f32 %v1115, 0.0
      %v1124 = vmax.f32 %v1116, 0.0
      %v1125 = vmax.f32 %v1117, 0.0
      %v1126 = vmax.f32 %v1118, 0.0
      %v1127 = vmax.f32 %v1119, 0.0
      %v1129 = vsel %vm439, %v1120, 0
      %v1132 = vsel %vm439, %v1121, 0
      %v1135 = vsel %vm439, %v1122, 0
      %v1138 = vsel %vm439, %v1123, 0
      %v1141 = vsel %vm439, %v1124, 0
      %v1144 = vsel %vm439, %v1125, 0
      %v1147 = vsel %vm439, %v1126, 0
      %v1150 = vsel %vm439, %v1127, 0
      %1152 = vmatprep.subr.mxu0 0.0
      %1153 = vmatpush1.msra.mxu0 0.0
      %1154 = vmatprep.subr.mxu0 0.0
      %1155 = vmatpush1.msra.mxu0 0.0
      %1156 = vmatprep.subr.mxu0 0.0
      %1157 = vmatpush1.msra.mxu0 0.0
      %1158 = vmatprep.subr.mxu0 0.0
      %1159 = vmatpush1.msra.mxu0 0.0
      %1160 = vmatprep.subr.mxu0 0.0
      %1161 = vmatpush1.msra.mxu0 0.0
      %1162 = vmatprep.subr.mxu0 0.0
      %1163 = vmatpush1.msra.mxu0 0.0
      %1164 = vmatprep.subr.mxu0 0.0
      %1165 = vmatpush1.msra.mxu0 0.0
      %1166 = vmatprep.subr.mxu0 0.0
      %1167 = vmatpush1.msra.mxu0 0.0
      %1168 = vmatprep.subr.mxu0 0.0
      %1169 = vmatpush1.msra.mxu0 0.0
      %1170 = vmatprep.subr.mxu0 0.0
      %1171 = vmatpush1.msra.mxu0 0.0
      %1172 = vmatprep.subr.mxu0 0.0
      %1173 = vmatpush1.msra.mxu0 0.0
      %1174 = vmatprep.subr.mxu0 0.0
      %1175 = vmatpush1.msra.mxu0 0.0
      %1176 = vmatprep.subr.mxu0 0.0
      %1177 = vmatpush1.msra.mxu0 %v346
      %1178 = vmatprep.subr.mxu0 0.0
      %1179 = vmatpush1.msra.mxu0 %v345
      %1180 = vmatprep.subr.mxu0 0.0
      %1181 = vmatpush1.msra.mxu0 %v344
      %1182 = vmatprep.subr.mxu0 0.0
      %1183 = vmatpush1.msra.mxu0 %v343
      %1184 = vmatprep.subr.mxu0 0.0
      %1185 = vmatpush2.msra.mxu0 0.0
      %1186 = vmatprep.subr.mxu0 0.0
      %1187 = vmatpush2.msra.mxu0 0.0
      %1188 = vmatprep.subr.mxu0 0.0
      %1189 = vmatpush2.msra.mxu0 0.0
      %1190 = vmatprep.subr.mxu0 0.0
      %1191 = vmatpush2.msra.mxu0 0.0
      %1192 = vmatprep.subr.mxu0 0.0
      %1193 = vmatpush2.msra.mxu0 0.0
      %1194 = vmatprep.subr.mxu0 0.0
      %1195 = vmatpush2.msra.mxu0 0.0
      %1196 = vmatprep.subr.mxu0 0.0
      %1197 = vmatpush2.msra.mxu0 0.0
      %1198 = vmatprep.subr.mxu0 0.0
      %1199 = vmatpush2.msra.mxu0 0.0
      %1200 = vmatprep.subr.mxu0 0.0
      %1201 = vmatpush2.msra.mxu0 0.0
      %1202 = vmatprep.subr.mxu0 0.0
      %1203 = vmatpush2.msra.mxu0 0.0
      %1204 = vmatprep.subr.mxu0 0.0
      %1205 = vmatpush2.msra.mxu0 0.0
      %1206 = vmatprep.subr.mxu0 0.0
      %1207 = vmatpush2.msra.mxu0 0.0
      %1208 = vmatprep.subr.mxu0 0.0
      %1209 = vmatpush2.msra.mxu0 0.0
      %1210 = vmatprep.subr.mxu0 0.0
      %1211 = vmatpush2.msra.mxu0 0.0
      %1212 = vmatprep.subr.mxu0 0.0
      %1213 = vmatpush2.msra.mxu0 0.0
      %1214 = vmatprep.subr.mxu0 0.0
      %1215 = vmatpush2.msra.mxu0 0.0
      %1216 = vmatprep.mubr.f32.mxu0 0.0
      %1217 = vmatmul.mubr.f32.gmra.mxu0 %v1129
      %v1218 = vpop.f32.mrf.mxu0
      %v1219 = vadd.f32 0.0, %v1218
      %v1220 = vpop.f32.mrf.mxu0
      %1221 = vmatprep.mubr.f32.mxu0 0.0
      %1222 = vmatmul.mubr.f32.gmra.mxu0 %v1132
      %v1223 = vpop.f32.mrf.mxu0
      %v1224 = vadd.f32 0.0, %v1223
      %v1225 = vpop.f32.mrf.mxu0
      %1226 = vmatprep.mubr.f32.mxu0 0.0
      %1227 = vmatmul.mubr.f32.gmra.mxu0 %v1135
      %v1228 = vpop.f32.mrf.mxu0
      %v1229 = vadd.f32 0.0, %v1228
      %v1230 = vpop.f32.mrf.mxu0
      %1231 = vmatprep.mubr.f32.mxu0 0.0
      %1232 = vmatmul.mubr.f32.gmra.mxu0 %v1138
      %v1233 = vpop.f32.mrf.mxu0
      %v1234 = vadd.f32 0.0, %v1233
      %v1235 = vpop.f32.mrf.mxu0
      %1236 = vmatprep.mubr.f32.mxu0 0.0
      %1237 = vmatmul.mubr.f32.gmra.mxu0 %v1141
      %v1238 = vpop.f32.mrf.mxu0
      %v1239 = vadd.f32 0.0, %v1238
      %v1240 = vpop.f32.mrf.mxu0
      %1241 = vmatprep.mubr.f32.mxu0 0.0
      %1242 = vmatmul.mubr.f32.gmra.mxu0 %v1144
      %v1243 = vpop.f32.mrf.mxu0
      %v1244 = vadd.f32 0.0, %v1243
      %v1245 = vpop.f32.mrf.mxu0
      %1246 = vmatprep.mubr.f32.mxu0 0.0
      %1247 = vmatmul.mubr.f32.gmra.mxu0 %v1147
      %v1248 = vpop.f32.mrf.mxu0
      %v1249 = vadd.f32 0.0, %v1248
      %v1250 = vpop.f32.mrf.mxu0
      %1251 = vmatprep.mubr.f32.mxu0 0.0
      %1252 = vmatmul.mubr.f32.gmra.mxu0 %v1150
      %v1253 = vpop.f32.mrf.mxu0
      %v1254 = vadd.f32 0.0, %v1253
      %v1255 = vpop.f32.mrf.mxu0
      %1256 = vdwg.mxu0
      %v1257 = vlaneseq
      %v1258 = vshrl.u32 %v1257, 7
      %v1259 = vsub.s32 6, %v1258
      %v1260 = vrot.slane %v347, %v1259
      %v1261 = vadd.f32 %v1219, %v1260
      %v1262 = vadd.f32 %v1224, %v1260
      %v1263 = vadd.f32 %v1229, %v1260
      %v1264 = vadd.f32 %v1234, %v1260
      %v1265 = vadd.f32 %v1239, %v1260
      %v1266 = vadd.f32 %v1244, %v1260
      %v1267 = vadd.f32 %v1249, %v1260
      %v1268 = vadd.f32 %v1254, %v1260
      %v1269 = vlaneseq
      %v1270 = vshrl.u32 %v1269, 7
      %v1271 = vsub.s32 0, %v1270
      %v1272 = vrot.slane %v326, %v1271
      %1274 = vbcast.lane.b32.xlu0 %v1272, 256
      %v1275 = vpop.permute.xlu0 %1274
      %v1276 = vlaneseq
      %v1277 = vshrl.u32 %v1276, 7
      %v1278 = vsub.s32 1, %v1277
      %v1279 = vrot.slane %v326, %v1278
      %1281 = vbcast.lane.b32.xlu0 %v1279, 256
      %v1282 = vpop.permute.xlu0 %1281
      %v1283 = vlaneseq
      %v1284 = vshrl.u32 %v1283, 7
      %v1285 = vsub.s32 2, %v1284
      %v1286 = vrot.slane %v326, %v1285
      %1288 = vbcast.lane.b32.xlu0 %v1286, 256
      %v1289 = vpop.permute.xlu0 %1288
      %v1290 = vlaneseq
      %v1291 = vshrl.u32 %v1290, 7
      %v1292 = vsub.s32 3, %v1291
      %v1293 = vrot.slane %v326, %v1292
      %1295 = vbcast.lane.b32.xlu0 %v1293, 256
      %v1296 = vpop.permute.xlu0 %1295
      %v1297 = vlaneseq
      %v1298 = vshrl.u32 %v1297, 7
      %v1299 = vsub.s32 4, %v1298
      %v1300 = vrot.slane %v326, %v1299
      %1302 = vbcast.lane.b32.xlu0 %v1300, 256
      %v1303 = vpop.permute.xlu0 %1302
      %v1304 = vlaneseq
      %v1305 = vshrl.u32 %v1304, 7
      %v1306 = vsub.s32 5, %v1305
      %v1307 = vrot.slane %v326, %v1306
      %1309 = vbcast.lane.b32.xlu0 %v1307, 256
      %v1310 = vpop.permute.xlu0 %1309
      %v1311 = vlaneseq
      %v1312 = vshrl.u32 %v1311, 7
      %v1313 = vsub.s32 6, %v1312
      %v1314 = vrot.slane %v326, %v1313
      %1316 = vbcast.lane.b32.xlu0 %v1314, 256
      %v1317 = vpop.permute.xlu0 %1316
      %v1318 = vlaneseq
      %v1319 = vshrl.u32 %v1318, 7
      %v1320 = vsub.s32 7, %v1319
      %v1321 = vrot.slane %v326, %v1320
      %1323 = vbcast.lane.b32.xlu0 %v1321, 256
      %v1324 = vpop.permute.xlu0 %1323
      %v1325 = vadd.f32 %v1261, %v1275
      %v1326 = vadd.f32 %v1262, %v1282
      %v1327 = vadd.f32 %v1263, %v1289
      %v1328 = vadd.f32 %v1264, %v1296
      %v1329 = vadd.f32 %v1265, %v1303
      %v1330 = vadd.f32 %v1266, %v1310
      %v1331 = vadd.f32 %v1267, %v1317
      %v1332 = vadd.f32 %v1268, %v1324
      %v1333 = vsel %vm439, %v1325, -inf
      %v1334 = vrot.slane %v1333, 4
      %v1335 = vmax.f32 %v1333, %v1334
      %v1336 = vrot.slane %v1335, 2
      %v1337 = vmax.f32 %v1335, %v1336
      %v1338 = vrot.slane %v1337, 1
      %v1339 = vmax.f32 %v1337, %v1338
      %v1340 = vsel %vm439, %v1326, -inf
      %v1341 = vrot.slane %v1340, 4
      %v1342 = vmax.f32 %v1340, %v1341
      %v1343 = vrot.slane %v1342, 2
      %v1344 = vmax.f32 %v1342, %v1343
      %v1345 = vrot.slane %v1344, 1
      %v1346 = vmax.f32 %v1344, %v1345
      %v1347 = vsel %vm439, %v1327, -inf
      %v1348 = vrot.slane %v1347, 4
      %v1349 = vmax.f32 %v1347, %v1348
      %v1350 = vrot.slane %v1349, 2
      %v1351 = vmax.f32 %v1349, %v1350
      %v1352 = vrot.slane %v1351, 1
      %v1353 = vmax.f32 %v1351, %v1352
      %v1354 = vsel %vm439, %v1328, -inf
      %v1355 = vrot.slane %v1354, 4
      %v1356 = vmax.f32 %v1354, %v1355
      %v1357 = vrot.slane %v1356, 2
      %v1358 = vmax.f32 %v1356, %v1357
      %v1359 = vrot.slane %v1358, 1
      %v1360 = vmax.f32 %v1358, %v1359
      %v1361 = vsel %vm439, %v1329, -inf
      %v1362 = vrot.slane %v1361, 4
      %v1363 = vmax.f32 %v1361, %v1362
      %v1364 = vrot.slane %v1363, 2
      %v1365 = vmax.f32 %v1363, %v1364
      %v1366 = vrot.slane %v1365, 1
      %v1367 = vmax.f32 %v1365, %v1366
      %v1368 = vsel %vm439, %v1330, -inf
      %v1369 = vrot.slane %v1368, 4
      %v1370 = vmax.f32 %v1368, %v1369
      %v1371 = vrot.slane %v1370, 2
      %v1372 = vmax.f32 %v1370, %v1371
      %v1373 = vrot.slane %v1372, 1
      %v1374 = vmax.f32 %v1372, %v1373
      %v1375 = vsel %vm439, %v1331, -inf
      %v1376 = vrot.slane %v1375, 4
      %v1377 = vmax.f32 %v1375, %v1376
      %v1378 = vrot.slane %v1377, 2
      %v1379 = vmax.f32 %v1377, %v1378
      %v1380 = vrot.slane %v1379, 1
      %v1381 = vmax.f32 %v1379, %v1380
      %v1382 = vsel %vm439, %v1332, -inf
      %v1383 = vrot.slane %v1382, 4
      %v1384 = vmax.f32 %v1382, %v1383
      %v1385 = vrot.slane %v1384, 2
      %v1386 = vmax.f32 %v1384, %v1385
      %v1387 = vrot.slane %v1386, 1
      %v1388 = vmax.f32 %v1386, %v1387
      %v1389 = vmax.f32 %v1339, 0.0
      %v1390 = vmax.f32 %v1346, 0.0
      %v1391 = vmax.f32 %v1353, 0.0
      %v1392 = vmax.f32 %v1360, 0.0
      %v1393 = vmax.f32 %v1367, 0.0
      %v1394 = vmax.f32 %v1374, 0.0
      %v1395 = vmax.f32 %v1381, 0.0
      %v1396 = vmax.f32 %v1388, 0.0
      %vm1405 = vcmask 1041409
      %v1406 = vsel %vm1405, %v1390, %v1389
      %vm1407 = vcmask 1042434
      %v1408 = vsel %vm1407, %v1391, %v1406
      %vm1409 = vcmask 1043459
      %v1410 = vsel %vm1409, %v1392, %v1408
      %vm1411 = vcmask 1044484
      %v1412 = vsel %vm1411, %v1393, %v1410
      %vm1413 = vcmask 1045509
      %v1414 = vsel %vm1413, %v1394, %v1412
      %vm1415 = vcmask 1046534
      %v1416 = vsel %vm1415, %v1395, %v1414
      %vm1417 = vcmask 1047559
      %v1418 = vsel %vm1417, %v1396, %v1416
      %v1420 = vsel %vm439, %v1418, %v923
      %s1421 = scalar_lea.vmem %s5, 128
      %v1422 = vld [vmem:[%s1421] sm:$0xff]
      %v1423 = vld [vmem:[%s1421 + $0x8] sm:$0xff]
      %v1424 = vld [vmem:[%s1421 + $0x10] sm:$0xff]
      %v1425 = vld [vmem:[%s1421 + $0x18] sm:$0xff]
      %v1426 = vld [vmem:[%s1421 + $0x20] sm:$0xff]
      %v1427 = vld [vmem:[%s1421 + $0x28] sm:$0xff]
      %v1428 = vld [vmem:[%s1421 + $0x30] sm:$0xff]
      %v1429 = vld [vmem:[%s1421 + $0x38] sm:$0xff]
      %v1430 = vld [vmem:[%s1421 + $0x40] sm:$0xff]
      %v1431 = vld [vmem:[%s1421 + $0x48] sm:$0xff]
      %v1432 = vld [vmem:[%s1421 + $0x50] sm:$0xff]
      %v1433 = vld [vmem:[%s1421 + $0x58] sm:$0xff]
      %v1434 = vld [vmem:[%s1421 + $0x60] sm:$0xff]
      %v1435 = vld [vmem:[%s1421 + $0x68] sm:$0xff]
      %v1436 = vld [vmem:[%s1421 + $0x70] sm:$0xff]
      %v1437 = vld [vmem:[%s1421 + $0x78] sm:$0xff]
      %1438 = vmatprep.subr.mxu0 0.0
      %1439 = vmatpush1.msra.mxu0 %v1437
      %1440 = vmatprep.subr.mxu0 0.0
      %1441 = vmatpush1.msra.mxu0 %v1436
      %1442 = vmatprep.subr.mxu0 0.0
      %1443 = vmatpush1.msra.mxu0 %v1435
      %1444 = vmatprep.subr.mxu0 0.0
      %1445 = vmatpush1.msra.mxu0 %v1434
      %1446 = vmatprep.subr.mxu0 0.0
      %1447 = vmatpush1.msra.mxu0 %v1433
      %1448 = vmatprep.subr.mxu0 0.0
      %1449 = vmatpush1.msra.mxu0 %v1432
      %1450 = vmatprep.subr.mxu0 0.0
      %1451 = vmatpush1.msra.mxu0 %v1431
      %1452 = vmatprep.subr.mxu0 0.0
      %1453 = vmatpush1.msra.mxu0 %v1430
      %1454 = vmatprep.subr.mxu0 0.0
      %1455 = vmatpush1.msra.mxu0 %v1429
      %1456 = vmatprep.subr.mxu0 0.0
      %1457 = vmatpush1.msra.mxu0 %v1428
      %1458 = vmatprep.subr.mxu0 0.0
      %1459 = vmatpush1.msra.mxu0 %v1427
      %1460 = vmatprep.subr.mxu0 0.0
      %1461 = vmatpush1.msra.mxu0 %v1426
      %1462 = vmatprep.subr.mxu0 0.0
      %1463 = vmatpush1.msra.mxu0 %v1425
      %1464 = vmatprep.subr.mxu0 0.0
      %1465 = vmatpush1.msra.mxu0 %v1424
      %1466 = vmatprep.subr.mxu0 0.0
      %1467 = vmatpush1.msra.mxu0 %v1423
      %1468 = vmatprep.subr.mxu0 0.0
      %1469 = vmatpush1.msra.mxu0 %v1422
      %1470 = vmatprep.subr.mxu0 0.0
      %1471 = vmatpush2.msra.mxu0 0.0
      %1472 = vmatprep.subr.mxu0 0.0
      %1473 = vmatpush2.msra.mxu0 0.0
      %1474 = vmatprep.subr.mxu0 0.0
      %1475 = vmatpush2.msra.mxu0 0.0
      %1476 = vmatprep.subr.mxu0 0.0
      %1477 = vmatpush2.msra.mxu0 0.0
      %1478 = vmatprep.subr.mxu0 0.0
      %1479 = vmatpush2.msra.mxu0 0.0
      %1480 = vmatprep.subr.mxu0 0.0
      %1481 = vmatpush2.msra.mxu0 0.0
      %1482 = vmatprep.subr.mxu0 0.0
      %1483 = vmatpush2.msra.mxu0 0.0
      %1484 = vmatprep.subr.mxu0 0.0
      %1485 = vmatpush2.msra.mxu0 0.0
      %1486 = vmatprep.subr.mxu0 0.0
      %1487 = vmatpush2.msra.mxu0 0.0
      %1488 = vmatprep.subr.mxu0 0.0
      %1489 = vmatpush2.msra.mxu0 0.0
      %1490 = vmatprep.subr.mxu0 0.0
      %1491 = vmatpush2.msra.mxu0 0.0
      %1492 = vmatprep.subr.mxu0 0.0
      %1493 = vmatpush2.msra.mxu0 0.0
      %1494 = vmatprep.subr.mxu0 0.0
      %1495 = vmatpush2.msra.mxu0 0.0
      %1496 = vmatprep.subr.mxu0 0.0
      %1497 = vmatpush2.msra.mxu0 0.0
      %1498 = vmatprep.subr.mxu0 0.0
      %1499 = vmatpush2.msra.mxu0 0.0
      %1500 = vmatprep.subr.mxu0 0.0
      %1501 = vmatpush2.msra.mxu0 0.0
      %1502 = vmatprep.mubr.f32.mxu0 0.0
      %1503 = vmatmul.mubr.f32.gmra.mxu0 %v1420
      %v1504 = vpop.f32.mrf.mxu0
      %v1505 = vadd.f32 0.0, %v1504
      %v1506 = vpop.f32.mrf.mxu0
      %1507 = vdwg.mxu0
      %v1508 = vlaneseq
      %v1509 = vshrl.u32 %v1508, 7
      %v1510 = vsub.s32 7, %v1509
      %v1511 = vrot.slane %v347, %v1510
      %v1512 = vadd.f32 %v1505, %v1511
      %1514 = vrot.lane.b32.xlu0 %v1505, 96
      %v1515 = vpop.permute.xlu0 %1514
      %v1517 = vsub.f32 %v1512, %v1515
      %v1519 = vcombine.high %v1517, %v1517
      %v1521 = vunpack.c.l.s4 1966171168
      %v1522 = vunpack.c.0.s8 %v1521
      %v1523 = vlaneseq
      %v1524 = vshrl.u32 %v1523, 7
      %v1525 = vsub.s32 %v1522, %v1524
      %v1526 = vrot.slane %v1517, %v1525
      %v1528 = vunpack.c.l.s4 1966171168
      %v1529 = vunpack.c.0.s8 %v1528
      %v1530 = vlaneseq
      %v1531 = vshrl.u32 %v1530, 7
      %v1532 = vsub.s32 %v1529, %v1531
      %v1533 = vrot.slane %v1519, %v1532
      %v1534 = vcombine.high %v1526, %v1526
      %v1535 = vcombine.high %v1533, %v1533
      %v1537 = vunpack.c.l.s4 1966171168
      %v1538 = vunpack.c.0.s8 %v1537
      %v1539 = vlaneseq
      %v1540 = vshrl.u32 %v1539, 7
      %v1541 = vsub.s32 %v1538, %v1540
      %v1542 = vrot.slane %v1526, %v1541
      %v1544 = vunpack.c.l.s4 1966171168
      %v1545 = vunpack.c.0.s8 %v1544
      %v1546 = vlaneseq
      %v1547 = vshrl.u32 %v1546, 7
      %v1548 = vsub.s32 %v1545, %v1547
      %v1549 = vrot.slane %v1533, %v1548
      %v1551 = vunpack.c.l.s4 1966171168
      %v1552 = vunpack.c.0.s8 %v1551
      %v1553 = vlaneseq
      %v1554 = vshrl.u32 %v1553, 7
      %v1555 = vsub.s32 %v1552, %v1554
      %v1556 = vrot.slane %v1534, %v1555
      %v1558 = vunpack.c.l.s4 1966171168
      %v1559 = vunpack.c.0.s8 %v1558
      %v1560 = vlaneseq
      %v1561 = vshrl.u32 %v1560, 7
      %v1562 = vsub.s32 %v1559, %v1561
      %v1563 = vrot.slane %v1535, %v1562
      %v1564 = vcombine.high %v1542, %v1542
      %v1565 = vcombine.high %v1549, %v1549
      %v1566 = vcombine.high %v1556, %v1556
      %v1567 = vcombine.high %v1563, %v1563
      %v1568 = vlaneseq
      %v1569 = vshrl.u32 %v1568, 7
      %v1570 = vsub.s32 0, %v1569
      %v1571 = vrot.slane %v1542, %v1570
      %v1572 = vlaneseq
      %v1573 = vshrl.u32 %v1572, 7
      %v1574 = vsub.s32 0, %v1573
      %v1575 = vrot.slane %v1556, %v1574
      %v1576 = vlaneseq
      %v1577 = vshrl.u32 %v1576, 7
      %v1578 = vsub.s32 0, %v1577
      %v1579 = vrot.slane %v1564, %v1578
      %v1580 = vlaneseq
      %v1581 = vshrl.u32 %v1580, 7
      %v1582 = vsub.s32 0, %v1581
      %v1583 = vrot.slane %v1566, %v1582
      %v1584 = vlaneseq
      %v1585 = vshrl.u32 %v1584, 7
      %v1586 = vsub.s32 0, %v1585
      %v1587 = vrot.slane %v1549, %v1586
      %v1588 = vlaneseq
      %v1589 = vshrl.u32 %v1588, 7
      %v1590 = vsub.s32 0, %v1589
      %v1591 = vrot.slane %v1563, %v1590
      %v1592 = vlaneseq
      %v1593 = vshrl.u32 %v1592, 7
      %v1594 = vsub.s32 0, %v1593
      %v1595 = vrot.slane %v1565, %v1594
      %v1596 = vlaneseq
      %v1597 = vshrl.u32 %v1596, 7
      %v1598 = vsub.s32 0, %v1597
      %v1599 = vrot.slane %v1567, %v1598
      %v1608 = vadd.f32 %v1571, %v1515
      %v1609 = vadd.f32 %v1575, %v1515
      %v1610 = vadd.f32 %v1579, %v1515
      %v1611 = vadd.f32 %v1583, %v1515
      %v1612 = vadd.f32 %v1587, %v1515
      %v1613 = vadd.f32 %v1591, %v1515
      %v1614 = vadd.f32 %v1595, %v1515
      %v1615 = vadd.f32 %v1599, %v1515
      %v1616 = vmax.f32 %v1608, 0.0
      %v1617 = vmax.f32 %v1609, 0.0
      %v1618 = vmax.f32 %v1610, 0.0
      %v1619 = vmax.f32 %v1611, 0.0
      %v1620 = vmax.f32 %v1612, 0.0
      %v1621 = vmax.f32 %v1613, 0.0
      %v1622 = vmax.f32 %v1614, 0.0
      %v1623 = vmax.f32 %v1615, 0.0
      %v1625 = vsel %vm439, %v1616, 0
      %v1628 = vsel %vm439, %v1617, 0
      %v1631 = vsel %vm439, %v1618, 0
      %v1634 = vsel %vm439, %v1619, 0
      %v1637 = vsel %vm439, %v1620, 0
      %v1640 = vsel %vm439, %v1621, 0
      %v1643 = vsel %vm439, %v1622, 0
      %v1646 = vsel %vm439, %v1623, 0
      %1648 = vmatprep.subr.mxu0 0.0
      %1649 = vmatpush1.msra.mxu0 0.0
      %1650 = vmatprep.subr.mxu0 0.0
      %1651 = vmatpush1.msra.mxu0 0.0
      %1652 = vmatprep.subr.mxu0 0.0
      %1653 = vmatpush1.msra.mxu0 0.0
      %1654 = vmatprep.subr.mxu0 0.0
      %1655 = vmatpush1.msra.mxu0 0.0
      %1656 = vmatprep.subr.mxu0 0.0
      %1657 = vmatpush1.msra.mxu0 0.0
      %1658 = vmatprep.subr.mxu0 0.0
      %1659 = vmatpush1.msra.mxu0 0.0
      %1660 = vmatprep.subr.mxu0 0.0
      %1661 = vmatpush1.msra.mxu0 0.0
      %1662 = vmatprep.subr.mxu0 0.0
      %1663 = vmatpush1.msra.mxu0 0.0
      %1664 = vmatprep.subr.mxu0 0.0
      %1665 = vmatpush1.msra.mxu0 0.0
      %1666 = vmatprep.subr.mxu0 0.0
      %1667 = vmatpush1.msra.mxu0 0.0
      %1668 = vmatprep.subr.mxu0 0.0
      %1669 = vmatpush1.msra.mxu0 0.0
      %1670 = vmatprep.subr.mxu0 0.0
      %1671 = vmatpush1.msra.mxu0 0.0
      %1672 = vmatprep.subr.mxu0 0.0
      %1673 = vmatpush1.msra.mxu0 %v351
      %1674 = vmatprep.subr.mxu0 0.0
      %1675 = vmatpush1.msra.mxu0 %v350
      %1676 = vmatprep.subr.mxu0 0.0
      %1677 = vmatpush1.msra.mxu0 %v349
      %1678 = vmatprep.subr.mxu0 0.0
      %1679 = vmatpush1.msra.mxu0 %v348
      %1680 = vmatprep.subr.mxu0 0.0
      %1681 = vmatpush2.msra.mxu0 0.0
      %1682 = vmatprep.subr.mxu0 0.0
      %1683 = vmatpush2.msra.mxu0 0.0
      %1684 = vmatprep.subr.mxu0 0.0
      %1685 = vmatpush2.msra.mxu0 0.0
      %1686 = vmatprep.subr.mxu0 0.0
      %1687 = vmatpush2.msra.mxu0 0.0
      %1688 = vmatprep.subr.mxu0 0.0
      %1689 = vmatpush2.msra.mxu0 0.0
      %1690 = vmatprep.subr.mxu0 0.0
      %1691 = vmatpush2.msra.mxu0 0.0
      %1692 = vmatprep.subr.mxu0 0.0
      %1693 = vmatpush2.msra.mxu0 0.0
      %1694 = vmatprep.subr.mxu0 0.0
      %1695 = vmatpush2.msra.mxu0 0.0
      %1696 = vmatprep.subr.mxu0 0.0
      %1697 = vmatpush2.msra.mxu0 0.0
      %1698 = vmatprep.subr.mxu0 0.0
      %1699 = vmatpush2.msra.mxu0 0.0
      %1700 = vmatprep.subr.mxu0 0.0
      %1701 = vmatpush2.msra.mxu0 0.0
      %1702 = vmatprep.subr.mxu0 0.0
      %1703 = vmatpush2.msra.mxu0 0.0
      %1704 = vmatprep.subr.mxu0 0.0
      %1705 = vmatpush2.msra.mxu0 0.0
      %1706 = vmatprep.subr.mxu0 0.0
      %1707 = vmatpush2.msra.mxu0 0.0
      %1708 = vmatprep.subr.mxu0 0.0
      %1709 = vmatpush2.msra.mxu0 0.0
      %1710 = vmatprep.subr.mxu0 0.0
      %1711 = vmatpush2.msra.mxu0 0.0
      %1712 = vmatprep.mubr.f32.mxu0 0.0
      %1713 = vmatmul.mubr.f32.gmra.mxu0 %v1625
      %v1714 = vpop.f32.mrf.mxu0
      %v1715 = vadd.f32 0.0, %v1714
      %v1716 = vpop.f32.mrf.mxu0
      %1717 = vmatprep.mubr.f32.mxu0 0.0
      %1718 = vmatmul.mubr.f32.gmra.mxu0 %v1628
      %v1719 = vpop.f32.mrf.mxu0
      %v1720 = vadd.f32 0.0, %v1719
      %v1721 = vpop.f32.mrf.mxu0
      %1722 = vmatprep.mubr.f32.mxu0 0.0
      %1723 = vmatmul.mubr.f32.gmra.mxu0 %v1631
      %v1724 = vpop.f32.mrf.mxu0
      %v1725 = vadd.f32 0.0, %v1724
      %v1726 = vpop.f32.mrf.mxu0
      %1727 = vmatprep.mubr.f32.mxu0 0.0
      %1728 = vmatmul.mubr.f32.gmra.mxu0 %v1634
      %v1729 = vpop.f32.mrf.mxu0
      %v1730 = vadd.f32 0.0, %v1729
      %v1731 = vpop.f32.mrf.mxu0
      %1732 = vmatprep.mubr.f32.mxu0 0.0
      %1733 = vmatmul.mubr.f32.gmra.mxu0 %v1637
      %v1734 = vpop.f32.mrf.mxu0
      %v1735 = vadd.f32 0.0, %v1734
      %v1736 = vpop.f32.mrf.mxu0
      %1737 = vmatprep.mubr.f32.mxu0 0.0
      %1738 = vmatmul.mubr.f32.gmra.mxu0 %v1640
      %v1739 = vpop.f32.mrf.mxu0
      %v1740 = vadd.f32 0.0, %v1739
      %v1741 = vpop.f32.mrf.mxu0
      %1742 = vmatprep.mubr.f32.mxu0 0.0
      %1743 = vmatmul.mubr.f32.gmra.mxu0 %v1643
      %v1744 = vpop.f32.mrf.mxu0
      %v1745 = vadd.f32 0.0, %v1744
      %v1746 = vpop.f32.mrf.mxu0
      %1747 = vmatprep.mubr.f32.mxu0 0.0
      %1748 = vmatmul.mubr.f32.gmra.mxu0 %v1646
      %v1749 = vpop.f32.mrf.mxu0
      %v1750 = vadd.f32 0.0, %v1749
      %v1751 = vpop.f32.mrf.mxu0
      %1752 = vdwg.mxu0
      %v1753 = vlaneseq
      %v1754 = vshrl.u32 %v1753, 7
      %v1755 = vsub.s32 0, %v1754
      %v1756 = vrot.slane %v352, %v1755
      %v1757 = vadd.f32 %v1715, %v1756
      %v1758 = vadd.f32 %v1720, %v1756
      %v1759 = vadd.f32 %v1725, %v1756
      %v1760 = vadd.f32 %v1730, %v1756
      %v1761 = vadd.f32 %v1735, %v1756
      %v1762 = vadd.f32 %v1740, %v1756
      %v1763 = vadd.f32 %v1745, %v1756
      %v1764 = vadd.f32 %v1750, %v1756
      %v1765 = vadd.f32 %v1757, %v1275
      %v1766 = vadd.f32 %v1758, %v1282
      %v1767 = vadd.f32 %v1759, %v1289
      %v1768 = vadd.f32 %v1760, %v1296
      %v1769 = vadd.f32 %v1761, %v1303
      %v1770 = vadd.f32 %v1762, %v1310
      %v1771 = vadd.f32 %v1763, %v1317
      %v1772 = vadd.f32 %v1764, %v1324
      %v1773 = vrot.slane %v1765, 4
      %v1774 = vmax.f32 %v1765, %v1773
      %v1775 = vrot.slane %v1774, 2
      %v1776 = vmax.f32 %v1774, %v1775
      %v1777 = vrot.slane %v1776, 1
      %v1778 = vmax.f32 %v1776, %v1777
      %v1779 = vrot.slane %v1766, 4
      %v1780 = vmax.f32 %v1766, %v1779
      %v1781 = vrot.slane %v1780, 2
      %v1782 = vmax.f32 %v1780, %v1781
      %v1783 = vrot.slane %v1782, 1
      %v1784 = vmax.f32 %v1782, %v1783
      %v1785 = vrot.slane %v1767, 4
      %v1786 = vmax.f32 %v1767, %v1785
      %v1787 = vrot.slane %v1786, 2
      %v1788 = vmax.f32 %v1786, %v1787
      %v1789 = vrot.slane %v1788, 1
      %v1790 = vmax.f32 %v1788, %v1789
      %v1791 = vrot.slane %v1768, 4
      %v1792 = vmax.f32 %v1768, %v1791
      %v1793 = vrot.slane %v1792, 2
      %v1794 = vmax.f32 %v1792, %v1793
      %v1795 = vrot.slane %v1794, 1
      %v1796 = vmax.f32 %v1794, %v1795
      %v1797 = vrot.slane %v1769, 4
      %v1798 = vmax.f32 %v1769, %v1797
      %v1799 = vrot.slane %v1798, 2
      %v1800 = vmax.f32 %v1798, %v1799
      %v1801 = vrot.slane %v1800, 1
      %v1802 = vmax.f32 %v1800, %v1801
      %v1803 = vrot.slane %v1770, 4
      %v1804 = vmax.f32 %v1770, %v1803
      %v1805 = vrot.slane %v1804, 2
      %v1806 = vmax.f32 %v1804, %v1805
      %v1807 = vrot.slane %v1806, 1
      %v1808 = vmax.f32 %v1806, %v1807
      %v1809 = vrot.slane %v1771, 4
      %v1810 = vmax.f32 %v1771, %v1809
      %v1811 = vrot.slane %v1810, 2
      %v1812 = vmax.f32 %v1810, %v1811
      %v1813 = vrot.slane %v1812, 1
      %v1814 = vmax.f32 %v1812, %v1813
      %v1815 = vrot.slane %v1772, 4
      %v1816 = vmax.f32 %v1772, %v1815
      %v1817 = vrot.slane %v1816, 2
      %v1818 = vmax.f32 %v1816, %v1817
      %v1819 = vrot.slane %v1818, 1
      %v1820 = vmax.f32 %v1818, %v1819
      %v1821 = vmul.f32 %v308, 2.0
      %v1822 = vmul.f32 %v1821, 3.218876
      %v1823 = vmul.f32 %v1822, 1.442695
      %v1824 = vpow.pop %v1823
      %v1825 = vsub.f32 %v1824, 1.0
      %v1826 = vrcp.pop 6.437752
      %v1827 = vmul.f32 %v1825, %v1826
      %v1828 = vrsqrt.pop %v1827
      %v1829 = vmul.f32 %v1827, %v1828
      %vm1830 = vcmp.eq.f32.partialorder %v1827, inf
      %v1831 = vsel %vm1830, %v1827, %v1829
      %vm1832 = vcmp.eq.f32.partialorder %v1827, 0.0
      %v1833 = vand.u32 %v1827, 2147483648
      %v1834 = vsel %vm1832, %v1833, %v1831
      %v1835 = vadd.f32 %v1834, 1e-07
      %1837 = vset.pattern.permute.xlu0 6
      %1838 = vperm.xlu0 %1837, %v1835
      %v1839 = vpop.permute.xlu0 %1838
      %v1840 = vrot.slane %v1839, 1
      %v1841 = vrot.slane %v1839, 2
      %v1842 = vrot.slane %v1839, 3
      %v1843 = vrot.slane %v1839, 4
      %v1844 = vrot.slane %v1839, 5
      %v1845 = vrot.slane %v1839, 6
      %v1846 = vrot.slane %v1839, 7
      %v1855 = vrcp.pop %v1839
      %v1856 = vmul.f32 %v1778, %v1855
      %v1857 = vrcp.pop %v1840
      %v1858 = vmul.f32 %v1784, %v1857
      %v1859 = vrcp.pop %v1841
      %v1860 = vmul.f32 %v1790, %v1859
      %v1861 = vrcp.pop %v1842
      %v1862 = vmul.f32 %v1796, %v1861
      %v1863 = vrcp.pop %v1843
      %v1864 = vmul.f32 %v1802, %v1863
      %v1865 = vrcp.pop %v1844
      %v1866 = vmul.f32 %v1808, %v1865
      %v1867 = vrcp.pop %v1845
      %v1868 = vmul.f32 %v1814, %v1867
      %v1869 = vrcp.pop %v1846
      %v1870 = vmul.f32 %v1820, %v1869
      %v1879 = vrot.slane %v1858, 7
      %v1880 = vsel %vm1405, %v1879, %v1856
      %v1881 = vrot.slane %v1860, 6
      %v1882 = vsel %vm1407, %v1881, %v1880
      %v1883 = vrot.slane %v1862, 5
      %v1884 = vsel %vm1409, %v1883, %v1882
      %v1885 = vrot.slane %v1864, 4
      %v1886 = vsel %vm1411, %v1885, %v1884
      %v1887 = vrot.slane %v1866, 3
      %v1888 = vsel %vm1413, %v1887, %v1886
      %v1889 = vrot.slane %v1868, 2
      %v1890 = vsel %vm1415, %v1889, %v1888
      %v1891 = vrot.slane %v1870, 1
      %v1892 = vsel %vm1417, %v1891, %v1890
      %1894 = vst [vmem:[%s307] sm:$0xff] %v1892
      %p1895 = scmp.lt.s32.totalorder %s18, 3
      %s1896 = scalar_select %p1895, %s18, 3
      %s1897 = smul.addr %s1896, 8
      %s1898 = scalar_lea.vmem %s7, %s1897
      // Predicated region
      $region49: #{cond_score_forward.1} parent=47 // pred_check
        %p1899 = pneg %p198
      $region50: #{cond_score_forward.1} parent=47 // pred_check_branch
        %1901 = sbr.rel (%p1899) target = $region52
      $region51: #{cond_score_forward.1} parent=47 // pred_region
        _
      $region52: #{cond_score_forward.1} parent=47 // pred_fallthru
        _
    $region48: #{cond_score_forward.1} parent=5 // pred_fallthru
      _
    %p1902 = scmp.le.s32.totalorder 2, %s13
    // Predicated region
    $region53: #{cond_score_forward.1} parent=5 // pred_check
      %p1903 = pneg %p1902
    $region54: #{cond_score_forward.1} parent=5 // pred_check_branch
      %1905 = sbr.rel (%p1903) target = $region56
    $region55: #{cond_score_forward.1} parent=5 // pred_region
      %s1906 = ssub.s32 %s13, 2
      // Predicated region
      $region57: #{cond_score_forward.1} parent=55 // pred_check
        %p1907 = pneg %p204
      $region58: #{cond_score_forward.1} parent=55 // pred_check_branch
        %1909 = sbr.rel (%p1907) target = $region60
      $region59: #{cond_score_forward.1} parent=55 // pred_region
        %p1910 = scmp.lt.s32.totalorder %s19, 3
        %s1911 = scalar_select %p1910, %s19, 3
        %s1912 = smul.addr %s1911, 8
        %s1913 = scalar_lea.vmem %s7, %s1912
      $region60: #{cond_score_forward.1} parent=55 // pred_fallthru
        _
    $region56: #{cond_score_forward.1} parent=5 // pred_fallthru
      _
  $region6: #{cond_score_forward.1} parent=0 // loop_footer
    %s17 = sadd.s32 1, %s13
  $region7: #{cond_score_forward.1} parent=0 // loop_footer_branch
    %12 = sbr.rel target = $region3
  $region8: #{cond_score_forward.1} parent=0 // loop_exit
    _

</llo_original>
